<compile_context>
chip_gen: v5e
topology: v5e:2x2
jax: 0.10.0
libtpu: 0.0.40
codegen_flags: <defaults>
</compile_context>

<pallas_src>
import functools

import jax
import jax.numpy as jnp
from jax.experimental import pallas as pl
from jax.experimental.pallas import tpu as pltpu


# ------------------------------ helpers ------------------------------------ #

def _round_up(x, m):
    return (x + m - 1) // m * m


def _sigmoid_via_tanh(x):
    # sigmoid(x) == 0.5 * (tanh(x/2) + 1): one EUP op instead of exp + recip.
    return 0.5 * (jnp.tanh(0.5 * x) + 1.0)


# ----------------------------- Pallas kernel ------------------------------- #

def _lstm_block_kernel(gx_ref, h0_ref, c0_ref, whh_ref, out_ref, h_scr, c_scr,
                       *, hidden, time_block):
    """One grid step == `time_block` LSTM timesteps for one batch tile.

    gx_ref : (Tb, Bb, 4*Hp) bf16  precomputed x @ W_ih^T + b, gate order (i,f,o,g)
    h0_ref : (Bb, Hp) f32         initial hidden for this batch tile
    c0_ref : (Bb, Hp) f32
    whh_ref: (Hp, 4*Hp) bf16      recurrent weight, gate order (i,f,o,g)
    out_ref: (Tb, Bb, Hp) f32
    h_scr/c_scr: (Bb, Hp) f32 carries, persist across the time-block axis.
    """
    # New batch tile starts at time-block 0 -> (re)load the initial state.
    @pl.when(pl.program_id(1) == 0)
    def _():
        h_scr[...] = h0_ref[...]
        c_scr[...] = c0_ref[...]

    H = hidden  # padded hidden (multiple of 128) => gate slices are lane-aligned

    def step(i, carry):
        h = h_scr[...]            # (Bb, Hp) f32
        c = c_scr[...]            # (Bb, Hp) f32
        # Only the recurrent (K = Hp) matmul remains on the serial path.
        # bf16 operands (MXU-native), f32 accumulation.
        gates = gx_ref[i].astype(jnp.float32) + jnp.dot(
            h.astype(jnp.bfloat16), whh_ref[...],
            preferred_element_type=jnp.float32)
        # Gate order (i, f, o, g): one sigmoid over a contiguous 3H slab.
        sig = _sigmoid_via_tanh(gates[:, :3 * H])
        ig = sig[:, 0 * H:1 * H]
        fg = sig[:, 1 * H:2 * H]
        og = sig[:, 2 * H:3 * H]
        gg = jnp.tanh(gates[:, 3 * H:4 * H])
        c_new = fg * c + ig * gg
        h_new = og * jnp.tanh(c_new)
        h_scr[...] = h_new
        c_scr[...] = c_new
        out_ref[i] = h_new        # lane-dense (Bb, Hp) store
        return carry

    # Partial unroll: LLO scheduling visibility without vreg-spill blowup.
    jax.lax.fori_loop(0, time_block, step, 0,
                      unroll=min(8, time_block))


def lstm_recurrence_pallas(gates_x, h0, c0, whh, hidden_pad, time_block,
                           batch_block):
    """gates_x: (Tp, Bp, 4*Hp) bf16; returns all hidden states (Tp, Bp, Hp) f32."""
    Tp, Bp, G = gates_x.shape
    Hp = hidden_pad
    assert G == 4 * Hp and Tp % time_block == 0 and Bp % batch_block == 0
    nb = Bp // batch_block
    nt = Tp // time_block
    Bb, Tb = batch_block, time_block

    kernel = functools.partial(_lstm_block_kernel, hidden=Hp,
                               time_block=time_block)

    # VMEM budget: gx/out double-buffered, W_hh single-buffered, h0/c0 + scratch.
    need = (2 * Tb * Bb * G * 2        # gx blocks (bf16, x2 buffers)
            + 2 * Tb * Bb * Hp * 4     # out blocks (f32, x2 buffers)
            + Hp * G * 2               # W_hh (bf16, single buffer)
            + 2 * 2 * Bb * Hp * 4      # h0/c0 blocks (f32, x2 buffers)
            + 2 * Bb * Hp * 4)         # h/c scratch
    vmem_limit = int(min(96 << 20, max(2 * need + (1 << 20), 32 << 20)))

    return pl.pallas_call(
        kernel,
        out_shape=jax.ShapeDtypeStruct((Tp, Bp, Hp), jnp.float32),
        grid_spec=pltpu.PrefetchScalarGridSpec(
            num_scalar_prefetch=0,
            grid=(nb, nt),
            in_specs=[
                pl.BlockSpec((Tb, Bb, G), lambda b, t: (t, b, 0)),   # gates_x
                pl.BlockSpec((Bb, Hp), lambda b, t: (b, 0)),         # h0
                pl.BlockSpec((Bb, Hp), lambda b, t: (b, 0)),         # c0
                # Constant block index across the whole grid: single-buffer it.
                pl.BlockSpec((Hp, G), lambda b, t: (0, 0),
                             pipeline_mode=pl.Buffered(1)),          # W_hh
            ],
            out_specs=pl.BlockSpec((Tb, Bb, Hp), lambda b, t: (t, b, 0)),
            scratch_shapes=[pltpu.VMEM((Bb, Hp), jnp.float32),   # h carry
                            pltpu.VMEM((Bb, Hp), jnp.float32)],  # c carry
        ),
        compiler_params=pltpu.CompilerParams(
            # batch tiles are independent (megacore on v7x); time is serial.
            dimension_semantics=("parallel", "arbitrary"),
            vmem_limit_bytes=vmem_limit),
    )(gates_x, h0, c0, whh)


# ------------------------------ Module wrapper ------------------------------ #

class LSTMEncoderPallas:
    """Mirrors muscaps LSTMEncoder (single-layer batch_first LSTM)."""

    def __init__(self, word_embed_dim, hidden_dim, fusion, key,
                 time_block=32, batch_block=None):
        assert fusion in ("init", "early", "late")
        self.word_embed_dim = word_embed_dim
        self.hidden_dim = hidden_dim
        self.fusion = fusion
        self.time_block = time_block
        self.batch_block = batch_block
        in_dim = word_embed_dim + hidden_dim if fusion == "early" else word_embed_dim
        self.in_dim = in_dim
        self.hidden_pad = _round_up(hidden_dim, 128)   # lane-aligned gate width

        # PyTorch nn.LSTM default init: U(-1/sqrt(H), 1/sqrt(H)) for all params.
        k = 1.0 / (hidden_dim ** 0.5)
        k1, k2, k3, k4 = jax.random.split(key, 4)
        w_ih = jax.random.uniform(k1, (4 * hidden_dim, in_dim), jnp.float32, -k, k)
        w_hh = jax.random.uniform(k2, (4 * hidden_dim, hidden_dim), jnp.float32, -k, k)
        b_ih = jax.random.uniform(k3, (4 * hidden_dim,), jnp.float32, -k, k)
        b_hh = jax.random.uniform(k4, (4 * hidden_dim,), jnp.float32, -k, k)

        # Unpadded, PyTorch-gate-order copies for the pure-JAX reference.
        self.wih_t = jnp.transpose(w_ih)               # (in_dim, 4H)
        self.whh_t = jnp.transpose(w_hh)               # (H, 4H)
        self.bias = b_ih + b_hh                        # (4H,)

        # Kernel-side packing: gate order (i, f, o, g), hidden padded to Hp,
        # padded lanes of weights/bias are exactly zero (keeps padded h lanes 0).
        H, Hp = hidden_dim, self.hidden_pad
        perm = jnp.array([0, 1, 3, 2], jnp.int32)      # (i,f,g,o) -> (i,f,o,g)

        wih_g = w_ih.reshape(4, H, in_dim)[perm]                       # (4,H,D)
        wih_g = jnp.pad(wih_g, ((0, 0), (0, Hp - H), (0, 0)))          # (4,Hp,D)
        self.wih_pad = jnp.transpose(wih_g, (2, 0, 1)).reshape(in_dim, 4 * Hp)

        bias_g = (b_ih + b_hh).reshape(4, H)[perm]                     # (4,H)
        self.bias_pad = jnp.pad(bias_g, ((0, 0), (0, Hp - H))).reshape(4 * Hp)

        whh_g = w_hh.reshape(4, H, H)[perm]                            # (4,Ho,Hi)
        whh_g = jnp.pad(whh_g, ((0, 0), (0, Hp - H), (0, Hp - H)))     # (4,Hp,Hp)
        self.whh_pad = jnp.transpose(whh_g, (2, 0, 1)).reshape(
            Hp, 4 * Hp).astype(jnp.bfloat16)                           # (Hp,4Hp) bf16

    # ---- fusion-dependent input assembly (matches the PyTorch forward) ----
    def _prepare(self, audio_embeds, word_embeds):
        B, T, _ = word_embeds.shape
        H = self.hidden_dim
        audio3 = audio_embeds[:, None, :]                # unsqueeze(1)
        c0 = jnp.zeros((B, H), jnp.float32)
        audio_rep = None
        if self.fusion == "init":
            lstm_input = word_embeds
            h0 = audio_embeds                            # h_init = audio embedding
        elif self.fusion == "early":
            h0 = jnp.zeros((B, H), jnp.float32)
            audio_rep = jnp.tile(audio3, (1, T, 1))
            lstm_input = jnp.concatenate([audio_rep, word_embeds], axis=2)
        else:  # 'late'
            audio_rep = jnp.tile(audio3, (1, T, 1))
            lstm_input = word_embeds
            h0 = jnp.zeros((B, H), jnp.float32)
        return lstm_input, h0, c0, audio_rep

    def __call__(self, audio_embeds, word_embeds, x_len, max_len=None):
        """max_len: optional STATIC int (pad_packed truncation). If None, the
        full-T masked output is returned (no host sync, wrapper stays jittable)."""
        lstm_input, h0, c0, audio_rep = self._prepare(audio_embeds, word_embeds)
        x_len = jnp.asarray(x_len, jnp.int32)
        B, T, _ = lstm_input.shape
        H, Hp = self.hidden_dim, self.hidden_pad
        Bp = _round_up(B, 8)                             # sublane-aligned batch
        bb = self.batch_block if self.batch_block is not None else Bp
        Bp = _round_up(Bp, bb)
        tb = min(self.time_block, _round_up(T, 8))       # clamp for short seqs
        Tp = _round_up(T, tb)

        # ---- hoisted input projection, emitted directly in the padded,
        # time-major, gate-major layout the kernel consumes: (Tp, Bp, 4*Hp) ----
        x_pad = jnp.pad(lstm_input.astype(jnp.float32),
                        ((0, Bp - B), (0, Tp - T), (0, 0)))
        gx = (jnp.einsum("btd,dg->tbg", x_pad, self.wih_pad)
              + self.bias_pad).astype(jnp.bfloat16)       # bf16 streaming

        h0p = jnp.pad(h0.astype(jnp.float32), ((0, Bp - B), (0, Hp - H)))
        c0p = jnp.zeros((Bp, Hp), jnp.float32)

        out_tbh = lstm_recurrence_pallas(gx, h0p, c0p, self.whh_pad, Hp, tb, bb)
        lstm_out = jnp.transpose(out_tbh, (1, 0, 2))[:B, :T, :H]   # (B, T, H)

        # pad_packed_sequence semantics: zero past each length (one XLA op).
        mask = (jnp.arange(T)[None, :, None] < x_len[:, None, None])
        lstm_out = lstm_out * mask.astype(lstm_out.dtype)
        if max_len is not None:                          # static truncation only
            lstm_out = lstm_out[:, :max_len]
            if audio_rep is not None:
                audio_rep = audio_rep[:, :max_len]

        if self.fusion == "late":
            lstm_out = jnp.concatenate([lstm_out, audio_rep[:, :lstm_out.shape[1]]],
                                       axis=2)
        return lstm_out

    # Pure-JAX reference (lax.scan, standard sigmoid, unpadded f32 weights).
    def reference(self, audio_embeds, word_embeds, x_len, max_len=None):
        lstm_input, h0, c0, audio_rep = self._prepare(audio_embeds, word_embeds)
        x_len = jnp.asarray(x_len, jnp.int32)
        T = lstm_input.shape[1] if max_len is None else max_len
        lstm_input = lstm_input[:, :T].astype(jnp.float32)
        H = self.hidden_dim

        def step(carry, x_t):
            h, c = carry
            gates = x_t @ self.wih_t + h @ self.whh_t + self.bias
            i = jax.nn.sigmoid(gates[:, 0 * H:1 * H])
            f = jax.nn.sigmoid(gates[:, 1 * H:2 * H])
            g = jnp.tanh(gates[:, 2 * H:3 * H])
            o = jax.nn.sigmoid(gates[:, 3 * H:4 * H])
            c = f * c + i * g
            h = o * jnp.tanh(c)
            return (h, c), h

        _, hs = jax.lax.scan(step, (h0.astype(jnp.float32), c0),
                             jnp.transpose(lstm_input, (1, 0, 2)))
        hs = jnp.transpose(hs, (1, 0, 2))                # (B, T, H)
        mask = (jnp.arange(T)[None, :, None] < x_len[:, None, None])
        out = hs * mask.astype(hs.dtype)
        if self.fusion == "late":
            out = jnp.concatenate([out, audio_rep[:, :T]], axis=2)
        return out


# ---------------------------------- Demo ------------------------------------ #

if __name__ == "__main__":
    B, T, E, H = 2, 8, 16, 32
    key = jax.random.PRNGKey(0)
    k_audio, k_word, k_params = jax.random.split(key, 3)

    audio_embeds = jax.random.normal(k_audio, (B, H), jnp.float32)
    word_embeds = jax.random.normal(k_word, (B, T, E), jnp.float32)
    x_len_list = [8, 5]
    x_len = jnp.array(x_len_list, jnp.int32)
    max_len = max(x_len_list)            # static, no device->host sync

    ok = True
    for fusion in ("init", "early", "late"):
        enc = LSTMEncoderPallas(E, H, fusion, k_params)
        out = enc(audio_embeds, word_embeds, x_len, max_len=max_len)
        jax.block_until_ready(out)
        ref = enc.reference(audio_embeds, word_embeds, x_len, max_len=max_len)
        # bf16 matmul operands -> looser tolerance vs. the f32 scan reference.
        if not bool(jnp.allclose(out, ref, atol=3e-2, rtol=3e-2)):
            ok = False
            print(f"MISMATCH in fusion={fusion}: "
                  f"max_err={float(jnp.max(jnp.abs(out - ref)))}")

    if ok:
        print("KERNEL_OK")
</pallas_src>

<mosaic_0001>
module attributes {stable_mosaic.version = 11 : i64} {
  func.func @_lstm_block_kernel(%arg0: i32, %arg1: i32, %arg2: memref<8x8x512xbf16, #tpu.memory_space<vmem>>, %arg3: memref<8x128xf32, #tpu.memory_space<vmem>>, %arg4: memref<8x128xf32, #tpu.memory_space<vmem>>, %arg5: memref<128x512xbf16, #tpu.memory_space<vmem>>, %arg6: memref<8x8x128xf32, #tpu.memory_space<vmem>>, %arg7: memref<8x128xf32, #tpu.memory_space<vmem>>, %arg8: memref<8x128xf32, #tpu.memory_space<vmem>>) attributes {dimension_semantics = [#tpu.dimension_semantics<parallel>, #tpu.dimension_semantics<arbitrary>], iteration_bounds = array<i64: 1, 1>, scalar_prefetch = 0 : i64, scratch_operands = 2 : i64, tpu.core_type = #tpu.core_type<tc>, window_params = [{transform_indices = @transform_0, window_bounds = array<i64: 8, 8, 512>}, {transform_indices = @transform_1, window_bounds = array<i64: 8, 128>}, {transform_indices = @transform_2, window_bounds = array<i64: 8, 128>}, {pipeline_mode = #tpu.pipeline_mode<synchronous>, transform_indices = @transform_3, window_bounds = array<i64: 128, 512>}, {transform_indices = @transform_4, window_bounds = array<i64: 8, 8, 128>}]} {
    %c0_i32 = arith.constant 0 : i32
    %0 = arith.cmpi eq, %arg1, %c0_i32 : i32
    %1 = arith.extui %0 : i1 to i32
    %c0_i32_0 = arith.constant 0 : i32
    %2 = arith.cmpi ne, %1, %c0_i32_0 : i32
    scf.if %2 {
      %c0_144 = arith.constant 0 : index
      %c0_145 = arith.constant 0 : index
      %275 = vector.load %arg3[%c0_144, %c0_145] : memref<8x128xf32, #tpu.memory_space<vmem>>, vector<8x128xf32>
      %c0_146 = arith.constant 0 : index
      %c0_147 = arith.constant 0 : index
      %276 = vector.load %arg7[%c0_146, %c0_147] : memref<8x128xf32, #tpu.memory_space<vmem>>, vector<8x128xf32>
      tpu.vector_store %arg7[%c0_146, %c0_147], %275 {strides = array<i32>} : memref<8x128xf32, #tpu.memory_space<vmem>>, vector<8x128xf32>,
      %c0_148 = arith.constant 0 : index
      %c0_149 = arith.constant 0 : index
      %277 = vector.load %arg4[%c0_148, %c0_149] : memref<8x128xf32, #tpu.memory_space<vmem>>, vector<8x128xf32>
      %c0_150 = arith.constant 0 : index
      %c0_151 = arith.constant 0 : index
      %278 = vector.load %arg8[%c0_150, %c0_151] : memref<8x128xf32, #tpu.memory_space<vmem>>, vector<8x128xf32>
      tpu.vector_store %arg8[%c0_150, %c0_151], %277 {strides = array<i32>} : memref<8x128xf32, #tpu.memory_space<vmem>>, vector<8x128xf32>,
    } else {
    }
    %c0_i32_1 = arith.constant 0 : i32
    %c0 = arith.constant 0 : index
    %c0_2 = arith.constant 0 : index
    %3 = vector.load %arg7[%c0, %c0_2] : memref<8x128xf32, #tpu.memory_space<vmem>>, vector<8x128xf32>
    %c0_3 = arith.constant 0 : index
    %c0_4 = arith.constant 0 : index
    %4 = vector.load %arg8[%c0_3, %c0_4] : memref<8x128xf32, #tpu.memory_space<vmem>>, vector<8x128xf32>
    %5 = arith.index_cast %c0_i32_1 : i32 to index
    %c0_5 = arith.constant 0 : index
    %c0_6 = arith.constant 0 : index
    %6 = vector.load %arg2[%5, %c0_5, %c0_6] : memref<8x8x512xbf16, #tpu.memory_space<vmem>>, vector<1x8x512xbf16>
    %7 = vector.shape_cast %6 : vector<1x8x512xbf16> to vector<8x512xbf16>
    %8 = arith.extf %7 : vector<8x512xbf16> to vector<8x512xf32>
    %9 = arith.truncf %3 : vector<8x128xf32> to vector<8x128xbf16>
    %c0_7 = arith.constant 0 : index
    %c0_8 = arith.constant 0 : index
    %10 = vector.load %arg5[%c0_7, %c0_8] : memref<128x512xbf16, #tpu.memory_space<vmem>>, vector<128x512xbf16>
    %cst = arith.constant dense<0.000000e+00> : vector<8x512xf32>
    %11 = tpu.matmul %9, %10, %cst {dimension_numbers = #tpu.dot_dimension_numbers<[1], [0], [0], [1], [0, 0, 1, 1], [], []>} : vector<8x128xbf16>, vector<128x512xbf16>, vector<8x512xf32> -> vector<8x512xf32>
    %12 = arith.addf %8, %11 : vector<8x512xf32>
    %13 = vector.extract_strided_slice %12 {offsets = [0, 0], sizes = [8, 384], strides = [1, 1]} : vector<8x512xf32> to vector<8x384xf32>
    %cst_9 = arith.constant 5.000000e-01 : f32
    %14 = vector.broadcast %cst_9 : f32 to vector<8x384xf32>
    %15 = arith.mulf %14, %13 : vector<8x384xf32>
    %16 = math.tanh %15 : vector<8x384xf32>
    %cst_10 = arith.constant 1.000000e+00 : f32
    %17 = vector.broadcast %cst_10 : f32 to vector<8x384xf32>
    %18 = arith.addf %16, %17 : vector<8x384xf32>
    %cst_11 = arith.constant 5.000000e-01 : f32
    %19 = vector.broadcast %cst_11 : f32 to vector<8x384xf32>
    %20 = arith.mulf %19, %18 : vector<8x384xf32>
    %21 = vector.extract_strided_slice %20 {offsets = [0, 0], sizes = [8, 128], strides = [1, 1]} : vector<8x384xf32> to vector<8x128xf32>
    %22 = vector.extract_strided_slice %20 {offsets = [0, 128], sizes = [8, 128], strides = [1, 1]} : vector<8x384xf32> to vector<8x128xf32>
    %23 = vector.extract_strided_slice %20 {offsets = [0, 256], sizes = [8, 128], strides = [1, 1]} : vector<8x384xf32> to vector<8x128xf32>
    %24 = vector.extract_strided_slice %12 {offsets = [0, 384], sizes = [8, 128], strides = [1, 1]} : vector<8x512xf32> to vector<8x128xf32>
    %25 = math.tanh %24 : vector<8x128xf32>
    %26 = arith.mulf %22, %4 : vector<8x128xf32>
    %27 = arith.mulf %21, %25 : vector<8x128xf32>
    %28 = arith.addf %26, %27 : vector<8x128xf32>
    %29 = math.tanh %28 : vector<8x128xf32>
    %30 = arith.mulf %23, %29 : vector<8x128xf32>
    %c0_12 = arith.constant 0 : index
    %c0_13 = arith.constant 0 : index
    %31 = vector.load %arg7[%c0_12, %c0_13] : memref<8x128xf32, #tpu.memory_space<vmem>>, vector<8x128xf32>
    tpu.vector_store %arg7[%c0_12, %c0_13], %30 {strides = array<i32>} : memref<8x128xf32, #tpu.memory_space<vmem>>, vector<8x128xf32>,
    %c0_14 = arith.constant 0 : index
    %c0_15 = arith.constant 0 : index
    %32 = vector.load %arg8[%c0_14, %c0_15] : memref<8x128xf32, #tpu.memory_space<vmem>>, vector<8x128xf32>
    tpu.vector_store %arg8[%c0_14, %c0_15], %28 {strides = array<i32>} : memref<8x128xf32, #tpu.memory_space<vmem>>, vector<8x128xf32>,
    %33 = arith.index_cast %c0_i32_1 : i32 to index
    %c0_16 = arith.constant 0 : index
    %c0_17 = arith.constant 0 : index
    %34 = vector.load %arg6[%33, %c0_16, %c0_17] : memref<8x8x128xf32, #tpu.memory_space<vmem>>, vector<1x8x128xf32>
    %35 = vector.shape_cast %34 : vector<1x8x128xf32> to vector<8x128xf32>
    %36 = vector.shape_cast %30 : vector<8x128xf32> to vector<1x8x128xf32>
    tpu.vector_store %arg6[%33, %c0_16, %c0_17], %36 {strides = array<i32>} : memref<8x8x128xf32, #tpu.memory_space<vmem>>, vector<1x8x128xf32>,
    %c1_i32 = arith.constant 1 : i32
    %c0_18 = arith.constant 0 : index
    %c0_19 = arith.constant 0 : index
    %37 = vector.load %arg7[%c0_18, %c0_19] : memref<8x128xf32, #tpu.memory_space<vmem>>, vector<8x128xf32>
    %c0_20 = arith.constant 0 : index
    %c0_21 = arith.constant 0 : index
    %38 = vector.load %arg8[%c0_20, %c0_21] : memref<8x128xf32, #tpu.memory_space<vmem>>, vector<8x128xf32>
    %39 = arith.index_cast %c1_i32 : i32 to index
    %c0_22 = arith.constant 0 : index
    %c0_23 = arith.constant 0 : index
    %40 = vector.load %arg2[%39, %c0_22, %c0_23] : memref<8x8x512xbf16, #tpu.memory_space<vmem>>, vector<1x8x512xbf16>
    %41 = vector.shape_cast %40 : vector<1x8x512xbf16> to vector<8x512xbf16>
    %42 = arith.extf %41 : vector<8x512xbf16> to vector<8x512xf32>
    %43 = arith.truncf %37 : vector<8x128xf32> to vector<8x128xbf16>
    %c0_24 = arith.constant 0 : index
    %c0_25 = arith.constant 0 : index
    %44 = vector.load %arg5[%c0_24, %c0_25] : memref<128x512xbf16, #tpu.memory_space<vmem>>, vector<128x512xbf16>
    %cst_26 = arith.constant dense<0.000000e+00> : vector<8x512xf32>
    %45 = tpu.matmul %43, %44, %cst_26 {dimension_numbers = #tpu.dot_dimension_numbers<[1], [0], [0], [1], [0, 0, 1, 1], [], []>} : vector<8x128xbf16>, vector<128x512xbf16>, vector<8x512xf32> -> vector<8x512xf32>
    %46 = arith.addf %42, %45 : vector<8x512xf32>
    %47 = vector.extract_strided_slice %46 {offsets = [0, 0], sizes = [8, 384], strides = [1, 1]} : vector<8x512xf32> to vector<8x384xf32>
    %cst_27 = arith.constant 5.000000e-01 : f32
    %48 = vector.broadcast %cst_27 : f32 to vector<8x384xf32>
    %49 = arith.mulf %48, %47 : vector<8x384xf32>
    %50 = math.tanh %49 : vector<8x384xf32>
    %cst_28 = arith.constant 1.000000e+00 : f32
    %51 = vector.broadcast %cst_28 : f32 to vector<8x384xf32>
    %52 = arith.addf %50, %51 : vector<8x384xf32>
    %cst_29 = arith.constant 5.000000e-01 : f32
    %53 = vector.broadcast %cst_29 : f32 to vector<8x384xf32>
    %54 = arith.mulf %53, %52 : vector<8x384xf32>
    %55 = vector.extract_strided_slice %54 {offsets = [0, 0], sizes = [8, 128], strides = [1, 1]} : vector<8x384xf32> to vector<8x128xf32>
    %56 = vector.extract_strided_slice %54 {offsets = [0, 128], sizes = [8, 128], strides = [1, 1]} : vector<8x384xf32> to vector<8x128xf32>
    %57 = vector.extract_strided_slice %54 {offsets = [0, 256], sizes = [8, 128], strides = [1, 1]} : vector<8x384xf32> to vector<8x128xf32>
    %58 = vector.extract_strided_slice %46 {offsets = [0, 384], sizes = [8, 128], strides = [1, 1]} : vector<8x512xf32> to vector<8x128xf32>
    %59 = math.tanh %58 : vector<8x128xf32>
    %60 = arith.mulf %56, %38 : vector<8x128xf32>
    %61 = arith.mulf %55, %59 : vector<8x128xf32>
    %62 = arith.addf %60, %61 : vector<8x128xf32>
    %63 = math.tanh %62 : vector<8x128xf32>
    %64 = arith.mulf %57, %63 : vector<8x128xf32>
    %c0_30 = arith.constant 0 : index
    %c0_31 = arith.constant 0 : index
    %65 = vector.load %arg7[%c0_30, %c0_31] : memref<8x128xf32, #tpu.memory_space<vmem>>, vector<8x128xf32>
    tpu.vector_store %arg7[%c0_30, %c0_31], %64 {strides = array<i32>} : memref<8x128xf32, #tpu.memory_space<vmem>>, vector<8x128xf32>,
    %c0_32 = arith.constant 0 : index
    %c0_33 = arith.constant 0 : index
    %66 = vector.load %arg8[%c0_32, %c0_33] : memref<8x128xf32, #tpu.memory_space<vmem>>, vector<8x128xf32>
    tpu.vector_store %arg8[%c0_32, %c0_33], %62 {strides = array<i32>} : memref<8x128xf32, #tpu.memory_space<vmem>>, vector<8x128xf32>,
    %67 = arith.index_cast %c1_i32 : i32 to index
    %c0_34 = arith.constant 0 : index
    %c0_35 = arith.constant 0 : index
    %68 = vector.load %arg6[%67, %c0_34, %c0_35] : memref<8x8x128xf32, #tpu.memory_space<vmem>>, vector<1x8x128xf32>
    %69 = vector.shape_cast %68 : vector<1x8x128xf32> to vector<8x128xf32>
    %70 = vector.shape_cast %64 : vector<8x128xf32> to vector<1x8x128xf32>
    tpu.vector_store %arg6[%67, %c0_34, %c0_35], %70 {strides = array<i32>} : memref<8x8x128xf32, #tpu.memory_space<vmem>>, vector<1x8x128xf32>,
    %c2_i32 = arith.constant 2 : i32
    %c0_36 = arith.constant 0 : index
    %c0_37 = arith.constant 0 : index
    %71 = vector.load %arg7[%c0_36, %c0_37] : memref<8x128xf32, #tpu.memory_space<vmem>>, vector<8x128xf32>
    %c0_38 = arith.constant 0 : index
    %c0_39 = arith.constant 0 : index
    %72 = vector.load %arg8[%c0_38, %c0_39] : memref<8x128xf32, #tpu.memory_space<vmem>>, vector<8x128xf32>
    %73 = arith.index_cast %c2_i32 : i32 to index
    %c0_40 = arith.constant 0 : index
    %c0_41 = arith.constant 0 : index
    %74 = vector.load %arg2[%73, %c0_40, %c0_41] : memref<8x8x512xbf16, #tpu.memory_space<vmem>>, vector<1x8x512xbf16>
    %75 = vector.shape_cast %74 : vector<1x8x512xbf16> to vector<8x512xbf16>
    %76 = arith.extf %75 : vector<8x512xbf16> to vector<8x512xf32>
    %77 = arith.truncf %71 : vector<8x128xf32> to vector<8x128xbf16>
    %c0_42 = arith.constant 0 : index
    %c0_43 = arith.constant 0 : index
    %78 = vector.load %arg5[%c0_42, %c0_43] : memref<128x512xbf16, #tpu.memory_space<vmem>>, vector<128x512xbf16>
    %cst_44 = arith.constant dense<0.000000e+00> : vector<8x512xf32>
    %79 = tpu.matmul %77, %78, %cst_44 {dimension_numbers = #tpu.dot_dimension_numbers<[1], [0], [0], [1], [0, 0, 1, 1], [], []>} : vector<8x128xbf16>, vector<128x512xbf16>, vector<8x512xf32> -> vector<8x512xf32>
    %80 = arith.addf %76, %79 : vector<8x512xf32>
    %81 = vector.extract_strided_slice %80 {offsets = [0, 0], sizes = [8, 384], strides = [1, 1]} : vector<8x512xf32> to vector<8x384xf32>
    %cst_45 = arith.constant 5.000000e-01 : f32
    %82 = vector.broadcast %cst_45 : f32 to vector<8x384xf32>
    %83 = arith.mulf %82, %81 : vector<8x384xf32>
    %84 = math.tanh %83 : vector<8x384xf32>
    %cst_46 = arith.constant 1.000000e+00 : f32
    %85 = vector.broadcast %cst_46 : f32 to vector<8x384xf32>
    %86 = arith.addf %84, %85 : vector<8x384xf32>
    %cst_47 = arith.constant 5.000000e-01 : f32
    %87 = vector.broadcast %cst_47 : f32 to vector<8x384xf32>
    %88 = arith.mulf %87, %86 : vector<8x384xf32>
    %89 = vector.extract_strided_slice %88 {offsets = [0, 0], sizes = [8, 128], strides = [1, 1]} : vector<8x384xf32> to vector<8x128xf32>
    %90 = vector.extract_strided_slice %88 {offsets = [0, 128], sizes = [8, 128], strides = [1, 1]} : vector<8x384xf32> to vector<8x128xf32>
    %91 = vector.extract_strided_slice %88 {offsets = [0, 256], sizes = [8, 128], strides = [1, 1]} : vector<8x384xf32> to vector<8x128xf32>
    %92 = vector.extract_strided_slice %80 {offsets = [0, 384], sizes = [8, 128], strides = [1, 1]} : vector<8x512xf32> to vector<8x128xf32>
    %93 = math.tanh %92 : vector<8x128xf32>
    %94 = arith.mulf %90, %72 : vector<8x128xf32>
    %95 = arith.mulf %89, %93 : vector<8x128xf32>
    %96 = arith.addf %94, %95 : vector<8x128xf32>
    %97 = math.tanh %96 : vector<8x128xf32>
    %98 = arith.mulf %91, %97 : vector<8x128xf32>
    %c0_48 = arith.constant 0 : index
    %c0_49 = arith.constant 0 : index
    %99 = vector.load %arg7[%c0_48, %c0_49] : memref<8x128xf32, #tpu.memory_space<vmem>>, vector<8x128xf32>
    tpu.vector_store %arg7[%c0_48, %c0_49], %98 {strides = array<i32>} : memref<8x128xf32, #tpu.memory_space<vmem>>, vector<8x128xf32>,
    %c0_50 = arith.constant 0 : index
    %c0_51 = arith.constant 0 : index
    %100 = vector.load %arg8[%c0_50, %c0_51] : memref<8x128xf32, #tpu.memory_space<vmem>>, vector<8x128xf32>
    tpu.vector_store %arg8[%c0_50, %c0_51], %96 {strides = array<i32>} : memref<8x128xf32, #tpu.memory_space<vmem>>, vector<8x128xf32>,
    %101 = arith.index_cast %c2_i32 : i32 to index
    %c0_52 = arith.constant 0 : index
    %c0_53 = arith.constant 0 : index
    %102 = vector.load %arg6[%101, %c0_52, %c0_53] : memref<8x8x128xf32, #tpu.memory_space<vmem>>, vector<1x8x128xf32>
    %103 = vector.shape_cast %102 : vector<1x8x128xf32> to vector<8x128xf32>
    %104 = vector.shape_cast %98 : vector<8x128xf32> to vector<1x8x128xf32>
    tpu.vector_store %arg6[%101, %c0_52, %c0_53], %104 {strides = array<i32>} : memref<8x8x128xf32, #tpu.memory_space<vmem>>, vector<1x8x128xf32>,
    %c3_i32 = arith.constant 3 : i32
    %c0_54 = arith.constant 0 : index
    %c0_55 = arith.constant 0 : index
    %105 = vector.load %arg7[%c0_54, %c0_55] : memref<8x128xf32, #tpu.memory_space<vmem>>, vector<8x128xf32>
    %c0_56 = arith.constant 0 : index
    %c0_57 = arith.constant 0 : index
    %106 = vector.load %arg8[%c0_56, %c0_57] : memref<8x128xf32, #tpu.memory_space<vmem>>, vector<8x128xf32>
    %107 = arith.index_cast %c3_i32 : i32 to index
    %c0_58 = arith.constant 0 : index
    %c0_59 = arith.constant 0 : index
    %108 = vector.load %arg2[%107, %c0_58, %c0_59] : memref<8x8x512xbf16, #tpu.memory_space<vmem>>, vector<1x8x512xbf16>
    %109 = vector.shape_cast %108 : vector<1x8x512xbf16> to vector<8x512xbf16>
    %110 = arith.extf %109 : vector<8x512xbf16> to vector<8x512xf32>
    %111 = arith.truncf %105 : vector<8x128xf32> to vector<8x128xbf16>
    %c0_60 = arith.constant 0 : index
    %c0_61 = arith.constant 0 : index
    %112 = vector.load %arg5[%c0_60, %c0_61] : memref<128x512xbf16, #tpu.memory_space<vmem>>, vector<128x512xbf16>
    %cst_62 = arith.constant dense<0.000000e+00> : vector<8x512xf32>
    %113 = tpu.matmul %111, %112, %cst_62 {dimension_numbers = #tpu.dot_dimension_numbers<[1], [0], [0], [1], [0, 0, 1, 1], [], []>} : vector<8x128xbf16>, vector<128x512xbf16>, vector<8x512xf32> -> vector<8x512xf32>
    %114 = arith.addf %110, %113 : vector<8x512xf32>
    %115 = vector.extract_strided_slice %114 {offsets = [0, 0], sizes = [8, 384], strides = [1, 1]} : vector<8x512xf32> to vector<8x384xf32>
    %cst_63 = arith.constant 5.000000e-01 : f32
    %116 = vector.broadcast %cst_63 : f32 to vector<8x384xf32>
    %117 = arith.mulf %116, %115 : vector<8x384xf32>
    %118 = math.tanh %117 : vector<8x384xf32>
    %cst_64 = arith.constant 1.000000e+00 : f32
    %119 = vector.broadcast %cst_64 : f32 to vector<8x384xf32>
    %120 = arith.addf %118, %119 : vector<8x384xf32>
    %cst_65 = arith.constant 5.000000e-01 : f32
    %121 = vector.broadcast %cst_65 : f32 to vector<8x384xf32>
    %122 = arith.mulf %121, %120 : vector<8x384xf32>
    %123 = vector.extract_strided_slice %122 {offsets = [0, 0], sizes = [8, 128], strides = [1, 1]} : vector<8x384xf32> to vector<8x128xf32>
    %124 = vector.extract_strided_slice %122 {offsets = [0, 128], sizes = [8, 128], strides = [1, 1]} : vector<8x384xf32> to vector<8x128xf32>
    %125 = vector.extract_strided_slice %122 {offsets = [0, 256], sizes = [8, 128], strides = [1, 1]} : vector<8x384xf32> to vector<8x128xf32>
    %126 = vector.extract_strided_slice %114 {offsets = [0, 384], sizes = [8, 128], strides = [1, 1]} : vector<8x512xf32> to vector<8x128xf32>
    %127 = math.tanh %126 : vector<8x128xf32>
    %128 = arith.mulf %124, %106 : vector<8x128xf32>
    %129 = arith.mulf %123, %127 : vector<8x128xf32>
    %130 = arith.addf %128, %129 : vector<8x128xf32>
    %131 = math.tanh %130 : vector<8x128xf32>
    %132 = arith.mulf %125, %131 : vector<8x128xf32>
    %c0_66 = arith.constant 0 : index
    %c0_67 = arith.constant 0 : index
    %133 = vector.load %arg7[%c0_66, %c0_67] : memref<8x128xf32, #tpu.memory_space<vmem>>, vector<8x128xf32>
    tpu.vector_store %arg7[%c0_66, %c0_67], %132 {strides = array<i32>} : memref<8x128xf32, #tpu.memory_space<vmem>>, vector<8x128xf32>,
    %c0_68 = arith.constant 0 : index
    %c0_69 = arith.constant 0 : index
    %134 = vector.load %arg8[%c0_68, %c0_69] : memref<8x128xf32, #tpu.memory_space<vmem>>, vector<8x128xf32>
    tpu.vector_store %arg8[%c0_68, %c0_69], %130 {strides = array<i32>} : memref<8x128xf32, #tpu.memory_space<vmem>>, vector<8x128xf32>,
    %135 = arith.index_cast %c3_i32 : i32 to index
    %c0_70 = arith.constant 0 : index
    %c0_71 = arith.constant 0 : index
    %136 = vector.load %arg6[%135, %c0_70, %c0_71] : memref<8x8x128xf32, #tpu.memory_space<vmem>>, vector<1x8x128xf32>
    %137 = vector.shape_cast %136 : vector<1x8x128xf32> to vector<8x128xf32>
    %138 = vector.shape_cast %132 : vector<8x128xf32> to vector<1x8x128xf32>
    tpu.vector_store %arg6[%135, %c0_70, %c0_71], %138 {strides = array<i32>} : memref<8x8x128xf32, #tpu.memory_space<vmem>>, vector<1x8x128xf32>,
    %c4_i32 = arith.constant 4 : i32
    %c0_72 = arith.constant 0 : index
    %c0_73 = arith.constant 0 : index
    %139 = vector.load %arg7[%c0_72, %c0_73] : memref<8x128xf32, #tpu.memory_space<vmem>>, vector<8x128xf32>
    %c0_74 = arith.constant 0 : index
    %c0_75 = arith.constant 0 : index
    %140 = vector.load %arg8[%c0_74, %c0_75] : memref<8x128xf32, #tpu.memory_space<vmem>>, vector<8x128xf32>
    %141 = arith.index_cast %c4_i32 : i32 to index
    %c0_76 = arith.constant 0 : index
    %c0_77 = arith.constant 0 : index
    %142 = vector.load %arg2[%141, %c0_76, %c0_77] : memref<8x8x512xbf16, #tpu.memory_space<vmem>>, vector<1x8x512xbf16>
    %143 = vector.shape_cast %142 : vector<1x8x512xbf16> to vector<8x512xbf16>
    %144 = arith.extf %143 : vector<8x512xbf16> to vector<8x512xf32>
    %145 = arith.truncf %139 : vector<8x128xf32> to vector<8x128xbf16>
    %c0_78 = arith.constant 0 : index
    %c0_79 = arith.constant 0 : index
    %146 = vector.load %arg5[%c0_78, %c0_79] : memref<128x512xbf16, #tpu.memory_space<vmem>>, vector<128x512xbf16>
    %cst_80 = arith.constant dense<0.000000e+00> : vector<8x512xf32>
    %147 = tpu.matmul %145, %146, %cst_80 {dimension_numbers = #tpu.dot_dimension_numbers<[1], [0], [0], [1], [0, 0, 1, 1], [], []>} : vector<8x128xbf16>, vector<128x512xbf16>, vector<8x512xf32> -> vector<8x512xf32>
    %148 = arith.addf %144, %147 : vector<8x512xf32>
    %149 = vector.extract_strided_slice %148 {offsets = [0, 0], sizes = [8, 384], strides = [1, 1]} : vector<8x512xf32> to vector<8x384xf32>
    %cst_81 = arith.constant 5.000000e-01 : f32
    %150 = vector.broadcast %cst_81 : f32 to vector<8x384xf32>
    %151 = arith.mulf %150, %149 : vector<8x384xf32>
    %152 = math.tanh %151 : vector<8x384xf32>
    %cst_82 = arith.constant 1.000000e+00 : f32
    %153 = vector.broadcast %cst_82 : f32 to vector<8x384xf32>
    %154 = arith.addf %152, %153 : vector<8x384xf32>
    %cst_83 = arith.constant 5.000000e-01 : f32
    %155 = vector.broadcast %cst_83 : f32 to vector<8x384xf32>
    %156 = arith.mulf %155, %154 : vector<8x384xf32>
    %157 = vector.extract_strided_slice %156 {offsets = [0, 0], sizes = [8, 128], strides = [1, 1]} : vector<8x384xf32> to vector<8x128xf32>
    %158 = vector.extract_strided_slice %156 {offsets = [0, 128], sizes = [8, 128], strides = [1, 1]} : vector<8x384xf32> to vector<8x128xf32>
    %159 = vector.extract_strided_slice %156 {offsets = [0, 256], sizes = [8, 128], strides = [1, 1]} : vector<8x384xf32> to vector<8x128xf32>
    %160 = vector.extract_strided_slice %148 {offsets = [0, 384], sizes = [8, 128], strides = [1, 1]} : vector<8x512xf32> to vector<8x128xf32>
    %161 = math.tanh %160 : vector<8x128xf32>
    %162 = arith.mulf %158, %140 : vector<8x128xf32>
    %163 = arith.mulf %157, %161 : vector<8x128xf32>
    %164 = arith.addf %162, %163 : vector<8x128xf32>
    %165 = math.tanh %164 : vector<8x128xf32>
    %166 = arith.mulf %159, %165 : vector<8x128xf32>
    %c0_84 = arith.constant 0 : index
    %c0_85 = arith.constant 0 : index
    %167 = vector.load %arg7[%c0_84, %c0_85] : memref<8x128xf32, #tpu.memory_space<vmem>>, vector<8x128xf32>
    tpu.vector_store %arg7[%c0_84, %c0_85], %166 {strides = array<i32>} : memref<8x128xf32, #tpu.memory_space<vmem>>, vector<8x128xf32>,
    %c0_86 = arith.constant 0 : index
    %c0_87 = arith.constant 0 : index
    %168 = vector.load %arg8[%c0_86, %c0_87] : memref<8x128xf32, #tpu.memory_space<vmem>>, vector<8x128xf32>
    tpu.vector_store %arg8[%c0_86, %c0_87], %164 {strides = array<i32>} : memref<8x128xf32, #tpu.memory_space<vmem>>, vector<8x128xf32>,
    %169 = arith.index_cast %c4_i32 : i32 to index
    %c0_88 = arith.constant 0 : index
    %c0_89 = arith.constant 0 : index
    %170 = vector.load %arg6[%169, %c0_88, %c0_89] : memref<8x8x128xf32, #tpu.memory_space<vmem>>, vector<1x8x128xf32>
    %171 = vector.shape_cast %170 : vector<1x8x128xf32> to vector<8x128xf32>
    %172 = vector.shape_cast %166 : vector<8x128xf32> to vector<1x8x128xf32>
    tpu.vector_store %arg6[%169, %c0_88, %c0_89], %172 {strides = array<i32>} : memref<8x8x128xf32, #tpu.memory_space<vmem>>, vector<1x8x128xf32>,
    %c5_i32 = arith.constant 5 : i32
    %c0_90 = arith.constant 0 : index
    %c0_91 = arith.constant 0 : index
    %173 = vector.load %arg7[%c0_90, %c0_91] : memref<8x128xf32, #tpu.memory_space<vmem>>, vector<8x128xf32>
    %c0_92 = arith.constant 0 : index
    %c0_93 = arith.constant 0 : index
    %174 = vector.load %arg8[%c0_92, %c0_93] : memref<8x128xf32, #tpu.memory_space<vmem>>, vector<8x128xf32>
    %175 = arith.index_cast %c5_i32 : i32 to index
    %c0_94 = arith.constant 0 : index
    %c0_95 = arith.constant 0 : index
    %176 = vector.load %arg2[%175, %c0_94, %c0_95] : memref<8x8x512xbf16, #tpu.memory_space<vmem>>, vector<1x8x512xbf16>
    %177 = vector.shape_cast %176 : vector<1x8x512xbf16> to vector<8x512xbf16>
    %178 = arith.extf %177 : vector<8x512xbf16> to vector<8x512xf32>
    %179 = arith.truncf %173 : vector<8x128xf32> to vector<8x128xbf16>
    %c0_96 = arith.constant 0 : index
    %c0_97 = arith.constant 0 : index
    %180 = vector.load %arg5[%c0_96, %c0_97] : memref<128x512xbf16, #tpu.memory_space<vmem>>, vector<128x512xbf16>
    %cst_98 = arith.constant dense<0.000000e+00> : vector<8x512xf32>
    %181 = tpu.matmul %179, %180, %cst_98 {dimension_numbers = #tpu.dot_dimension_numbers<[1], [0], [0], [1], [0, 0, 1, 1], [], []>} : vector<8x128xbf16>, vector<128x512xbf16>, vector<8x512xf32> -> vector<8x512xf32>
    %182 = arith.addf %178, %181 : vector<8x512xf32>
    %183 = vector.extract_strided_slice %182 {offsets = [0, 0], sizes = [8, 384], strides = [1, 1]} : vector<8x512xf32> to vector<8x384xf32>
    %cst_99 = arith.constant 5.000000e-01 : f32
    %184 = vector.broadcast %cst_99 : f32 to vector<8x384xf32>
    %185 = arith.mulf %184, %183 : vector<8x384xf32>
    %186 = math.tanh %185 : vector<8x384xf32>
    %cst_100 = arith.constant 1.000000e+00 : f32
    %187 = vector.broadcast %cst_100 : f32 to vector<8x384xf32>
    %188 = arith.addf %186, %187 : vector<8x384xf32>
    %cst_101 = arith.constant 5.000000e-01 : f32
    %189 = vector.broadcast %cst_101 : f32 to vector<8x384xf32>
    %190 = arith.mulf %189, %188 : vector<8x384xf32>
    %191 = vector.extract_strided_slice %190 {offsets = [0, 0], sizes = [8, 128], strides = [1, 1]} : vector<8x384xf32> to vector<8x128xf32>
    %192 = vector.extract_strided_slice %190 {offsets = [0, 128], sizes = [8, 128], strides = [1, 1]} : vector<8x384xf32> to vector<8x128xf32>
    %193 = vector.extract_strided_slice %190 {offsets = [0, 256], sizes = [8, 128], strides = [1, 1]} : vector<8x384xf32> to vector<8x128xf32>
    %194 = vector.extract_strided_slice %182 {offsets = [0, 384], sizes = [8, 128], strides = [1, 1]} : vector<8x512xf32> to vector<8x128xf32>
    %195 = math.tanh %194 : vector<8x128xf32>
    %196 = arith.mulf %192, %174 : vector<8x128xf32>
    %197 = arith.mulf %191, %195 : vector<8x128xf32>
    %198 = arith.addf %196, %197 : vector<8x128xf32>
    %199 = math.tanh %198 : vector<8x128xf32>
    %200 = arith.mulf %193, %199 : vector<8x128xf32>
    %c0_102 = arith.constant 0 : index
    %c0_103 = arith.constant 0 : index
    %201 = vector.load %arg7[%c0_102, %c0_103] : memref<8x128xf32, #tpu.memory_space<vmem>>, vector<8x128xf32>
    tpu.vector_store %arg7[%c0_102, %c0_103], %200 {strides = array<i32>} : memref<8x128xf32, #tpu.memory_space<vmem>>, vector<8x128xf32>,
    %c0_104 = arith.constant 0 : index
    %c0_105 = arith.constant 0 : index
    %202 = vector.load %arg8[%c0_104, %c0_105] : memref<8x128xf32, #tpu.memory_space<vmem>>, vector<8x128xf32>
    tpu.vector_store %arg8[%c0_104, %c0_105], %198 {strides = array<i32>} : memref<8x128xf32, #tpu.memory_space<vmem>>, vector<8x128xf32>,
    %203 = arith.index_cast %c5_i32 : i32 to index
    %c0_106 = arith.constant 0 : index
    %c0_107 = arith.constant 0 : index
    %204 = vector.load %arg6[%203, %c0_106, %c0_107] : memref<8x8x128xf32, #tpu.memory_space<vmem>>, vector<1x8x128xf32>
    %205 = vector.shape_cast %204 : vector<1x8x128xf32> to vector<8x128xf32>
    %206 = vector.shape_cast %200 : vector<8x128xf32> to vector<1x8x128xf32>
    tpu.vector_store %arg6[%203, %c0_106, %c0_107], %206 {strides = array<i32>} : memref<8x8x128xf32, #tpu.memory_space<vmem>>, vector<1x8x128xf32>,
    %c6_i32 = arith.constant 6 : i32
    %c0_108 = arith.constant 0 : index
    %c0_109 = arith.constant 0 : index
    %207 = vector.load %arg7[%c0_108, %c0_109] : memref<8x128xf32, #tpu.memory_space<vmem>>, vector<8x128xf32>
    %c0_110 = arith.constant 0 : index
    %c0_111 = arith.constant 0 : index
    %208 = vector.load %arg8[%c0_110, %c0_111] : memref<8x128xf32, #tpu.memory_space<vmem>>, vector<8x128xf32>
    %209 = arith.index_cast %c6_i32 : i32 to index
    %c0_112 = arith.constant 0 : index
    %c0_113 = arith.constant 0 : index
    %210 = vector.load %arg2[%209, %c0_112, %c0_113] : memref<8x8x512xbf16, #tpu.memory_space<vmem>>, vector<1x8x512xbf16>
    %211 = vector.shape_cast %210 : vector<1x8x512xbf16> to vector<8x512xbf16>
    %212 = arith.extf %211 : vector<8x512xbf16> to vector<8x512xf32>
    %213 = arith.truncf %207 : vector<8x128xf32> to vector<8x128xbf16>
    %c0_114 = arith.constant 0 : index
    %c0_115 = arith.constant 0 : index
    %214 = vector.load %arg5[%c0_114, %c0_115] : memref<128x512xbf16, #tpu.memory_space<vmem>>, vector<128x512xbf16>
    %cst_116 = arith.constant dense<0.000000e+00> : vector<8x512xf32>
    %215 = tpu.matmul %213, %214, %cst_116 {dimension_numbers = #tpu.dot_dimension_numbers<[1], [0], [0], [1], [0, 0, 1, 1], [], []>} : vector<8x128xbf16>, vector<128x512xbf16>, vector<8x512xf32> -> vector<8x512xf32>
    %216 = arith.addf %212, %215 : vector<8x512xf32>
    %217 = vector.extract_strided_slice %216 {offsets = [0, 0], sizes = [8, 384], strides = [1, 1]} : vector<8x512xf32> to vector<8x384xf32>
    %cst_117 = arith.constant 5.000000e-01 : f32
    %218 = vector.broadcast %cst_117 : f32 to vector<8x384xf32>
    %219 = arith.mulf %218, %217 : vector<8x384xf32>
    %220 = math.tanh %219 : vector<8x384xf32>
    %cst_118 = arith.constant 1.000000e+00 : f32
    %221 = vector.broadcast %cst_118 : f32 to vector<8x384xf32>
    %222 = arith.addf %220, %221 : vector<8x384xf32>
    %cst_119 = arith.constant 5.000000e-01 : f32
    %223 = vector.broadcast %cst_119 : f32 to vector<8x384xf32>
    %224 = arith.mulf %223, %222 : vector<8x384xf32>
    %225 = vector.extract_strided_slice %224 {offsets = [0, 0], sizes = [8, 128], strides = [1, 1]} : vector<8x384xf32> to vector<8x128xf32>
    %226 = vector.extract_strided_slice %224 {offsets = [0, 128], sizes = [8, 128], strides = [1, 1]} : vector<8x384xf32> to vector<8x128xf32>
    %227 = vector.extract_strided_slice %224 {offsets = [0, 256], sizes = [8, 128], strides = [1, 1]} : vector<8x384xf32> to vector<8x128xf32>
    %228 = vector.extract_strided_slice %216 {offsets = [0, 384], sizes = [8, 128], strides = [1, 1]} : vector<8x512xf32> to vector<8x128xf32>
    %229 = math.tanh %228 : vector<8x128xf32>
    %230 = arith.mulf %226, %208 : vector<8x128xf32>
    %231 = arith.mulf %225, %229 : vector<8x128xf32>
    %232 = arith.addf %230, %231 : vector<8x128xf32>
    %233 = math.tanh %232 : vector<8x128xf32>
    %234 = arith.mulf %227, %233 : vector<8x128xf32>
    %c0_120 = arith.constant 0 : index
    %c0_121 = arith.constant 0 : index
    %235 = vector.load %arg7[%c0_120, %c0_121] : memref<8x128xf32, #tpu.memory_space<vmem>>, vector<8x128xf32>
    tpu.vector_store %arg7[%c0_120, %c0_121], %234 {strides = array<i32>} : memref<8x128xf32, #tpu.memory_space<vmem>>, vector<8x128xf32>,
    %c0_122 = arith.constant 0 : index
    %c0_123 = arith.constant 0 : index
    %236 = vector.load %arg8[%c0_122, %c0_123] : memref<8x128xf32, #tpu.memory_space<vmem>>, vector<8x128xf32>
    tpu.vector_store %arg8[%c0_122, %c0_123], %232 {strides = array<i32>} : memref<8x128xf32, #tpu.memory_space<vmem>>, vector<8x128xf32>,
    %237 = arith.index_cast %c6_i32 : i32 to index
    %c0_124 = arith.constant 0 : index
    %c0_125 = arith.constant 0 : index
    %238 = vector.load %arg6[%237, %c0_124, %c0_125] : memref<8x8x128xf32, #tpu.memory_space<vmem>>, vector<1x8x128xf32>
    %239 = vector.shape_cast %238 : vector<1x8x128xf32> to vector<8x128xf32>
    %240 = vector.shape_cast %234 : vector<8x128xf32> to vector<1x8x128xf32>
    tpu.vector_store %arg6[%237, %c0_124, %c0_125], %240 {strides = array<i32>} : memref<8x8x128xf32, #tpu.memory_space<vmem>>, vector<1x8x128xf32>,
    %c7_i32 = arith.constant 7 : i32
    %c0_126 = arith.constant 0 : index
    %c0_127 = arith.constant 0 : index
    %241 = vector.load %arg7[%c0_126, %c0_127] : memref<8x128xf32, #tpu.memory_space<vmem>>, vector<8x128xf32>
    %c0_128 = arith.constant 0 : index
    %c0_129 = arith.constant 0 : index
    %242 = vector.load %arg8[%c0_128, %c0_129] : memref<8x128xf32, #tpu.memory_space<vmem>>, vector<8x128xf32>
    %243 = arith.index_cast %c7_i32 : i32 to index
    %c0_130 = arith.constant 0 : index
    %c0_131 = arith.constant 0 : index
    %244 = vector.load %arg2[%243, %c0_130, %c0_131] : memref<8x8x512xbf16, #tpu.memory_space<vmem>>, vector<1x8x512xbf16>
    %245 = vector.shape_cast %244 : vector<1x8x512xbf16> to vector<8x512xbf16>
    %246 = arith.extf %245 : vector<8x512xbf16> to vector<8x512xf32>
    %247 = arith.truncf %241 : vector<8x128xf32> to vector<8x128xbf16>
    %c0_132 = arith.constant 0 : index
    %c0_133 = arith.constant 0 : index
    %248 = vector.load %arg5[%c0_132, %c0_133] : memref<128x512xbf16, #tpu.memory_space<vmem>>, vector<128x512xbf16>
    %cst_134 = arith.constant dense<0.000000e+00> : vector<8x512xf32>
    %249 = tpu.matmul %247, %248, %cst_134 {dimension_numbers = #tpu.dot_dimension_numbers<[1], [0], [0], [1], [0, 0, 1, 1], [], []>} : vector<8x128xbf16>, vector<128x512xbf16>, vector<8x512xf32> -> vector<8x512xf32>
    %250 = arith.addf %246, %249 : vector<8x512xf32>
    %251 = vector.extract_strided_slice %250 {offsets = [0, 0], sizes = [8, 384], strides = [1, 1]} : vector<8x512xf32> to vector<8x384xf32>
    %cst_135 = arith.constant 5.000000e-01 : f32
    %252 = vector.broadcast %cst_135 : f32 to vector<8x384xf32>
    %253 = arith.mulf %252, %251 : vector<8x384xf32>
    %254 = math.tanh %253 : vector<8x384xf32>
    %cst_136 = arith.constant 1.000000e+00 : f32
    %255 = vector.broadcast %cst_136 : f32 to vector<8x384xf32>
    %256 = arith.addf %254, %255 : vector<8x384xf32>
    %cst_137 = arith.constant 5.000000e-01 : f32
    %257 = vector.broadcast %cst_137 : f32 to vector<8x384xf32>
    %258 = arith.mulf %257, %256 : vector<8x384xf32>
    %259 = vector.extract_strided_slice %258 {offsets = [0, 0], sizes = [8, 128], strides = [1, 1]} : vector<8x384xf32> to vector<8x128xf32>
    %260 = vector.extract_strided_slice %258 {offsets = [0, 128], sizes = [8, 128], strides = [1, 1]} : vector<8x384xf32> to vector<8x128xf32>
    %261 = vector.extract_strided_slice %258 {offsets = [0, 256], sizes = [8, 128], strides = [1, 1]} : vector<8x384xf32> to vector<8x128xf32>
    %262 = vector.extract_strided_slice %250 {offsets = [0, 384], sizes = [8, 128], strides = [1, 1]} : vector<8x512xf32> to vector<8x128xf32>
    %263 = math.tanh %262 : vector<8x128xf32>
    %264 = arith.mulf %260, %242 : vector<8x128xf32>
    %265 = arith.mulf %259, %263 : vector<8x128xf32>
    %266 = arith.addf %264, %265 : vector<8x128xf32>
    %267 = math.tanh %266 : vector<8x128xf32>
    %268 = arith.mulf %261, %267 : vector<8x128xf32>
    %c0_138 = arith.constant 0 : index
    %c0_139 = arith.constant 0 : index
    %269 = vector.load %arg7[%c0_138, %c0_139] : memref<8x128xf32, #tpu.memory_space<vmem>>, vector<8x128xf32>
    tpu.vector_store %arg7[%c0_138, %c0_139], %268 {strides = array<i32>} : memref<8x128xf32, #tpu.memory_space<vmem>>, vector<8x128xf32>,
    %c0_140 = arith.constant 0 : index
    %c0_141 = arith.constant 0 : index
    %270 = vector.load %arg8[%c0_140, %c0_141] : memref<8x128xf32, #tpu.memory_space<vmem>>, vector<8x128xf32>
    tpu.vector_store %arg8[%c0_140, %c0_141], %266 {strides = array<i32>} : memref<8x128xf32, #tpu.memory_space<vmem>>, vector<8x128xf32>,
    %271 = arith.index_cast %c7_i32 : i32 to index
    %c0_142 = arith.constant 0 : index
    %c0_143 = arith.constant 0 : index
    %272 = vector.load %arg6[%271, %c0_142, %c0_143] : memref<8x8x128xf32, #tpu.memory_space<vmem>>, vector<1x8x128xf32>
    %273 = vector.shape_cast %272 : vector<1x8x128xf32> to vector<8x128xf32>
    %274 = vector.shape_cast %268 : vector<8x128xf32> to vector<1x8x128xf32>
    tpu.vector_store %arg6[%271, %c0_142, %c0_143], %274 {strides = array<i32>} : memref<8x8x128xf32, #tpu.memory_space<vmem>>, vector<1x8x128xf32>,
    %c8_i32 = arith.constant 8 : i32
    return
  }
  func.func @transform_0(%arg0: i32, %arg1: i32) -> (i32, i32, i32) {
    %c0_i32 = arith.constant 0 : i32
    %c0_i32_0 = arith.constant 0 : i32
    return %arg1, %arg0, %c0_i32 : i32, i32, i32
  }
  func.func @transform_1(%arg0: i32, %arg1: i32) -> (i32, i32) {
    %c0_i32 = arith.constant 0 : i32
    %c0_i32_0 = arith.constant 0 : i32
    return %arg0, %c0_i32 : i32, i32
  }
  func.func @transform_2(%arg0: i32, %arg1: i32) -> (i32, i32) {
    %c0_i32 = arith.constant 0 : i32
    %c0_i32_0 = arith.constant 0 : i32
    return %arg0, %c0_i32 : i32, i32
  }
  func.func @transform_3(%arg0: i32, %arg1: i32) -> (i32, i32) {
    %c0_i32 = arith.constant 0 : i32
    %c0_i32_0 = arith.constant 0 : i32
    %c0_i32_1 = arith.constant 0 : i32
    return %c0_i32, %c0_i32_0 : i32, i32
  }
  func.func @transform_4(%arg0: i32, %arg1: i32) -> (i32, i32, i32) {
    %c0_i32 = arith.constant 0 : i32
    %c0_i32_0 = arith.constant 0 : i32
    return %arg1, %arg0, %c0_i32 : i32, i32, i32
  }
}

</mosaic_0001>

<llo_original>
// kernel: tpu_custom_call.1
$region0: #{tpu_custom_call.1}
  #allocation0 [shape = 'u32[]', space=smem, size = 0x4, offset = 0x4, fixed_abs, tag = 'smem constant byte address 0x4 - core index']
  #allocation1 [shape = 'u32[72,128]{1,0:T(1,128)}', space=vmem, size = 0x9000, scoped, tag = 'internal scratch']
  #allocation2 [shape = 'f32[8,128]{1,0:T(8,128)}', space=vmem, size = 0x1000, scoped, tag = 'scratch operand']
  #allocation3 [shape = 'f32[8,128]{1,0:T(8,128)}', space=vmem, size = 0x1000, scoped, tag = 'scratch operand']
  %s0 = inlined_call_operand.hbm [shape: bf16[8,8,512], index: 0, kind: input, shape index: {}]
  %s1 = inlined_call_operand.hbm [shape: f32[8,128], index: 1, kind: input, shape index: {}]
  %s2 = inlined_call_operand.hbm [shape: f32[8,128], index: 2, kind: input, shape index: {}]
  %s3 = inlined_call_operand.hbm [shape: bf16[128,512], index: 3, kind: input, shape index: {}]
  %s4 = inlined_call_operand.hbm [shape: f32[8,8,128], index: 4, kind: output, shape index: {}]
  %s5 = sld [smem:[#allocation0]]
  $region46: #{tpu_custom_call.1} parent=0
    _
  %s7 = ssub.s32 1, %s5
  %s8 = scalar_select 0, %s7, %s5
  $region1: #{tpu_custom_call.1} parent=0
    #allocation4 [shape = 'u8[65536]{0}', space=vmem, size = 0x10000, scoped, tag = 'input window, operand 0, single buffered']
    #allocation5 [shape = 's32[1]{0}', space=sflag, size = 0x4, scoped, tag = 'scoped memory for tpu_custom_call.1']
    #allocation6 [shape = 's32[1]{0}', space=sflag, size = 0x4, scoped, tag = 'scoped memory for tpu_custom_call.1']
    #allocation7 [shape = 'u8[4096]{0}', space=vmem, size = 0x1000, scoped, tag = 'input window, operand 1, single buffered']
    #allocation8 [shape = 's32[1]{0}', space=sflag, size = 0x4, scoped, tag = 'scoped memory for tpu_custom_call.1']
    #allocation9 [shape = 'u8[4096]{0}', space=vmem, size = 0x1000, scoped, tag = 'input window, operand 2, single buffered']
    #allocation10 [shape = 'u8[131072]{0}', space=vmem, size = 0x20000, scoped, tag = 'input window, operand 3, single buffered']
    #allocation11 [shape = 's32[1]{0}', space=sflag, size = 0x4, scoped, tag = 'scoped memory for tpu_custom_call.1']
    #allocation12 [shape = 'u8[32768]{0}', space=vmem, size = 0x8000, scoped, tag = 'output window, operand 0, single buffered']
    %9 = vsyncpa [#allocation5], 0
    %10 = vsyncpa [#allocation8], 0
    %11 = vsyncpa [#allocation11], 0
    %12 = vsyncpa [#allocation6], 0
    // Predicated region
    $region2: #{tpu_custom_call.1} parent=1 // pred_check
      _
    $region3: #{tpu_custom_call.1} parent=1 // pred_check_branch
      %14 = sbr.rel (0) target = $region5
    $region4: #{tpu_custom_call.1} parent=1 // pred_region
      %16 = vsyncadd [#allocation5], 0
      %s17 = sshll.u32 %s0, 4
      %s18 = int_to_ptr.hbm [resolvable:$true] %s17
      %s19 = sshll.u32 [#allocation4], 4
      %s20 = int_to_ptr.vmem [resolvable:$true] %s19
      %25 = dma.hbm_to_vmem [thread:$0]  %s18, 2048, %s20, [#allocation5], 256, 256, 16
    $region5: #{tpu_custom_call.1} parent=1 // pred_fallthru
      _
    // Predicated region
    $region6: #{tpu_custom_call.1} parent=1 // pred_check
      _
    $region7: #{tpu_custom_call.1} parent=1 // pred_check_branch
      %27 = sbr.rel (0) target = $region9
    $region8: #{tpu_custom_call.1} parent=1 // pred_region
      %29 = vsyncadd [#allocation8], 0
      %s31 = sshll.u32 %s1, 4
      %s32 = int_to_ptr.hbm [resolvable:$true] %s31
      %s33 = sshll.u32 [#allocation7], 4
      %s34 = int_to_ptr.vmem [resolvable:$true] %s33
      %36 = dma.hbm_to_vmem [thread:$0]  %s32, 128, %s34, [#allocation8]
    $region9: #{tpu_custom_call.1} parent=1 // pred_fallthru
      _
    // Predicated region
    $region10: #{tpu_custom_call.1} parent=1 // pred_check
      _
    $region11: #{tpu_custom_call.1} parent=1 // pred_check_branch
      %38 = sbr.rel (0) target = $region13
    $region12: #{tpu_custom_call.1} parent=1 // pred_region
      %40 = vsyncadd [#allocation8], 0
      %s42 = sshll.u32 %s2, 4
      %s43 = int_to_ptr.hbm [resolvable:$true] %s42
      %s44 = sshll.u32 [#allocation9], 4
      %s45 = int_to_ptr.vmem [resolvable:$true] %s44
      %47 = dma.hbm_to_vmem [thread:$0]  %s43, 128, %s45, [#allocation8]
    $region13: #{tpu_custom_call.1} parent=1 // pred_fallthru
      _
    // Predicated region
    $region14: #{tpu_custom_call.1} parent=1 // pred_check
      _
    $region15: #{tpu_custom_call.1} parent=1 // pred_check_branch
      %49 = sbr.rel (0) target = $region17
    $region16: #{tpu_custom_call.1} parent=1 // pred_region
      %51 = vsyncadd [#allocation11], 0
      %s52 = sshll.u32 %s3, 4
      %s53 = int_to_ptr.hbm [resolvable:$true] %s52
      %s54 = sshll.u32 [#allocation10], 4
      %s55 = int_to_ptr.vmem [resolvable:$true] %s54
      %60 = dma.hbm_to_vmem [thread:$0]  %s53, 4096, %s55, [#allocation11], 256, 256, 16
    $region17: #{tpu_custom_call.1} parent=1 // pred_fallthru
      _
    // Predicated region
    $region18: #{tpu_custom_call.1} parent=1 // pred_check
      _
    $region19: #{tpu_custom_call.1} parent=1 // pred_check_branch
      %62 = sbr.rel (0) target = $region21
    $region20: #{tpu_custom_call.1} parent=1 // pred_region
      %64 = dma.done [#allocation5], 2048
    $region21: #{tpu_custom_call.1} parent=1 // pred_fallthru
      _
    // Predicated region
    $region22: #{tpu_custom_call.1} parent=1 // pred_check
      _
    $region23: #{tpu_custom_call.1} parent=1 // pred_check_branch
      %66 = sbr.rel (0) target = $region25
    $region24: #{tpu_custom_call.1} parent=1 // pred_region
      %68 = dma.done [#allocation8], 128
    $region25: #{tpu_custom_call.1} parent=1 // pred_fallthru
      _
    // Predicated region
    $region26: #{tpu_custom_call.1} parent=1 // pred_check
      _
    $region27: #{tpu_custom_call.1} parent=1 // pred_check_branch
      %70 = sbr.rel (0) target = $region29
    $region28: #{tpu_custom_call.1} parent=1 // pred_region
      %72 = dma.done [#allocation8], 128
    $region29: #{tpu_custom_call.1} parent=1 // pred_fallthru
      _
    // Predicated region
    $region30: #{tpu_custom_call.1} parent=1 // pred_check
      _
    $region31: #{tpu_custom_call.1} parent=1 // pred_check_branch
      %74 = sbr.rel (0) target = $region33
    $region32: #{tpu_custom_call.1} parent=1 // pred_region
      %76 = dma.done [#allocation11], 4096
    $region33: #{tpu_custom_call.1} parent=1 // pred_fallthru
      _
    %p77 = scmp.eq.s32.totalorder 0, 0
    // Predicated region
    $region34: #{tpu_custom_call.1} parent=1 // pred_check
      %p78 = pneg %p77
    $region35: #{tpu_custom_call.1} parent=1 // pred_check_branch
      %80 = sbr.rel (%p78) target = $region37
    $region36: #{tpu_custom_call.1} parent=1 // pred_region
      %v81 = vld [vmem:[#allocation7] sm:$0xff]
      %82 = vst [vmem:[#allocation2] sm:$0xff] %v81
      %v83 = vld [vmem:[#allocation9] sm:$0xff]
      %84 = vst [vmem:[#allocation3] sm:$0xff] %v83
    $region37: #{tpu_custom_call.1} parent=1 // pred_fallthru
      _
    %v85 = vld [vmem:[#allocation2] sm:$0xff]
    %v86 = vld [vmem:[#allocation3] sm:$0xff]
    %v87 = vld [vmem:[#allocation4] sm:$0xff]
    %v88 = vld [vmem:[#allocation4 + $0x8] sm:$0xff]
    %v89 = vunpack.c.l.bf16 %v87
    %v90 = vunpack.c.h.bf16 %v87
    %v91 = vunpack.c.l.bf16 %v88
    %v92 = vunpack.c.h.bf16 %v88
    %v93 = vpack.c.bf16 %v85, %v85
    %v94 = vld [vmem:[#allocation10] sm:$0xff]
    %v95 = vld [vmem:[#allocation10 + $0x8] sm:$0xff]
    %v96 = vld [vmem:[#allocation10 + $0x10] sm:$0xff]
    %v97 = vld [vmem:[#allocation10 + $0x18] sm:$0xff]
    %v98 = vld [vmem:[#allocation10 + $0x20] sm:$0xff]
    %v99 = vld [vmem:[#allocation10 + $0x28] sm:$0xff]
    %v100 = vld [vmem:[#allocation10 + $0x30] sm:$0xff]
    %v101 = vld [vmem:[#allocation10 + $0x38] sm:$0xff]
    %v102 = vld [vmem:[#allocation10 + $0x40] sm:$0xff]
    %v103 = vld [vmem:[#allocation10 + $0x48] sm:$0xff]
    %v104 = vld [vmem:[#allocation10 + $0x50] sm:$0xff]
    %v105 = vld [vmem:[#allocation10 + $0x58] sm:$0xff]
    %v106 = vld [vmem:[#allocation10 + $0x60] sm:$0xff]
    %v107 = vld [vmem:[#allocation10 + $0x68] sm:$0xff]
    %v108 = vld [vmem:[#allocation10 + $0x70] sm:$0xff]
    %v109 = vld [vmem:[#allocation10 + $0x78] sm:$0xff]
    %v110 = vld [vmem:[#allocation10 + $0x80] sm:$0xff]
    %v111 = vld [vmem:[#allocation10 + $0x88] sm:$0xff]
    %v112 = vld [vmem:[#allocation10 + $0x90] sm:$0xff]
    %v113 = vld [vmem:[#allocation10 + $0x98] sm:$0xff]
    %v114 = vld [vmem:[#allocation10 + $0xa0] sm:$0xff]
    %v115 = vld [vmem:[#allocation10 + $0xa8] sm:$0xff]
    %v116 = vld [vmem:[#allocation10 + $0xb0] sm:$0xff]
    %v117 = vld [vmem:[#allocation10 + $0xb8] sm:$0xff]
    %v118 = vld [vmem:[#allocation10 + $0xc0] sm:$0xff]
    %v119 = vld [vmem:[#allocation10 + $0xc8] sm:$0xff]
    %v120 = vld [vmem:[#allocation10 + $0xd0] sm:$0xff]
    %v121 = vld [vmem:[#allocation10 + $0xd8] sm:$0xff]
    %v122 = vld [vmem:[#allocation10 + $0xe0] sm:$0xff]
    %v123 = vld [vmem:[#allocation10 + $0xe8] sm:$0xff]
    %v124 = vld [vmem:[#allocation10 + $0xf0] sm:$0xff]
    %v125 = vld [vmem:[#allocation10 + $0xf8] sm:$0xff]
    %v158 = vunpack.c.l.b16 %v94
    %v159 = vunpack.c.h.b16 %v94
    %v160 = vunpack.c.l.b16 %v95
    %v161 = vunpack.c.h.b16 %v95
    %v162 = vunpack.c.l.b16 %v96
    %v163 = vunpack.c.h.b16 %v96
    %v164 = vunpack.c.l.b16 %v97
    %v165 = vunpack.c.h.b16 %v97
    %v166 = vunpack.c.l.b16 %v98
    %v167 = vunpack.c.h.b16 %v98
    %v168 = vunpack.c.l.b16 %v99
    %v169 = vunpack.c.h.b16 %v99
    %v170 = vunpack.c.l.b16 %v100
    %v171 = vunpack.c.h.b16 %v100
    %v172 = vunpack.c.l.b16 %v101
    %v173 = vunpack.c.h.b16 %v101
    %v174 = vunpack.c.l.b16 %v102
    %v175 = vunpack.c.h.b16 %v102
    %v176 = vunpack.c.l.b16 %v103
    %v177 = vunpack.c.h.b16 %v103
    %v178 = vunpack.c.l.b16 %v104
    %v179 = vunpack.c.h.b16 %v104
    %v180 = vunpack.c.l.b16 %v105
    %v181 = vunpack.c.h.b16 %v105
    %v182 = vunpack.c.l.b16 %v106
    %v183 = vunpack.c.h.b16 %v106
    %v184 = vunpack.c.l.b16 %v107
    %v185 = vunpack.c.h.b16 %v107
    %v186 = vunpack.c.l.b16 %v108
    %v187 = vunpack.c.h.b16 %v108
    %v188 = vunpack.c.l.b16 %v109
    %v189 = vunpack.c.h.b16 %v109
    %v190 = vunpack.c.l.b16 %v110
    %v191 = vunpack.c.h.b16 %v110
    %v192 = vunpack.c.l.b16 %v111
    %v193 = vunpack.c.h.b16 %v111
    %v194 = vunpack.c.l.b16 %v112
    %v195 = vunpack.c.h.b16 %v112
    %v196 = vunpack.c.l.b16 %v113
    %v197 = vunpack.c.h.b16 %v113
    %v198 = vunpack.c.l.b16 %v114
    %v199 = vunpack.c.h.b16 %v114
    %v200 = vunpack.c.l.b16 %v115
    %v201 = vunpack.c.h.b16 %v115
    %v202 = vunpack.c.l.b16 %v116
    %v203 = vunpack.c.h.b16 %v116
    %v204 = vunpack.c.l.b16 %v117
    %v205 = vunpack.c.h.b16 %v117
    %v206 = vunpack.c.l.b16 %v118
    %v207 = vunpack.c.h.b16 %v118
    %v208 = vunpack.c.l.b16 %v119
    %v209 = vunpack.c.h.b16 %v119
    %v210 = vunpack.c.l.b16 %v120
    %v211 = vunpack.c.h.b16 %v120
    %v212 = vunpack.c.l.b16 %v121
    %v213 = vunpack.c.h.b16 %v121
    %v214 = vunpack.c.l.b16 %v122
    %v215 = vunpack.c.h.b16 %v122
    %v216 = vunpack.c.l.b16 %v123
    %v217 = vunpack.c.h.b16 %v123
    %v218 = vunpack.c.l.b16 %v124
    %v219 = vunpack.c.h.b16 %v124
    %v220 = vunpack.c.l.b16 %v125
    %v221 = vunpack.c.h.b16 %v125
    %v222 = vpack.c.b16 %v162, %v158
    %v223 = vpack.c.b16 %v163, %v159
    %v224 = vpack.c.b16 %v164, %v160
    %v225 = vpack.c.b16 %v165, %v161
    %v226 = vpack.c.b16 %v170, %v166
    %v227 = vpack.c.b16 %v171, %v167
    %v228 = vpack.c.b16 %v172, %v168
    %v229 = vpack.c.b16 %v173, %v169
    %v230 = vpack.c.b16 %v178, %v174
    %v231 = vpack.c.b16 %v179, %v175
    %v232 = vpack.c.b16 %v180, %v176
    %v233 = vpack.c.b16 %v181, %v177
    %v234 = vpack.c.b16 %v186, %v182
    %v235 = vpack.c.b16 %v187, %v183
    %v236 = vpack.c.b16 %v188, %v184
    %v237 = vpack.c.b16 %v189, %v185
    %v238 = vpack.c.b16 %v194, %v190
    %v239 = vpack.c.b16 %v195, %v191
    %v240 = vpack.c.b16 %v196, %v192
    %v241 = vpack.c.b16 %v197, %v193
    %v242 = vpack.c.b16 %v202, %v198
    %v243 = vpack.c.b16 %v203, %v199
    %v244 = vpack.c.b16 %v204, %v200
    %v245 = vpack.c.b16 %v205, %v201
    %v246 = vpack.c.b16 %v210, %v206
    %v247 = vpack.c.b16 %v211, %v207
    %v248 = vpack.c.b16 %v212, %v208
    %v249 = vpack.c.b16 %v213, %v209
    %v250 = vpack.c.b16 %v218, %v214
    %v251 = vpack.c.b16 %v219, %v215
    %v252 = vpack.c.b16 %v220, %v216
    %v253 = vpack.c.b16 %v221, %v217
    %286 = vmatpush.bf16.msra.mxu0 %v250
    %287 = vmatpush.bf16.msra.mxu0 %v246
    %288 = vmatpush.bf16.msra.mxu0 %v242
    %289 = vmatpush.bf16.msra.mxu0 %v238
    %290 = vmatpush.bf16.msra.mxu0 %v234
    %291 = vmatpush.bf16.msra.mxu0 %v230
    %292 = vmatpush.bf16.msra.mxu0 %v226
    %293 = vmatpush.bf16.msra.mxu0 %v222
    %294 = vmatmul.bf16.gmra.mxu0 %v93
    %v295 = vpop.f32.mrf.mxu0
    %v296 = vadd.f32 0.0, %v295
    %v297 = vpop.f32.mrf.mxu0
    %298 = vdwg.mxu0
    %299 = vmatpush.bf16.msra.mxu0 %v251
    %300 = vmatpush.bf16.msra.mxu0 %v247
    %301 = vmatpush.bf16.msra.mxu0 %v243
    %302 = vmatpush.bf16.msra.mxu0 %v239
    %303 = vmatpush.bf16.msra.mxu0 %v235
    %304 = vmatpush.bf16.msra.mxu0 %v231
    %305 = vmatpush.bf16.msra.mxu0 %v227
    %306 = vmatpush.bf16.msra.mxu0 %v223
    %307 = vmatmul.bf16.gmra.mxu0 %v93
    %v308 = vpop.f32.mrf.mxu0
    %v309 = vadd.f32 0.0, %v308
    %v310 = vpop.f32.mrf.mxu0
    %311 = vdwg.mxu0
    %312 = vmatpush.bf16.msra.mxu0 %v252
    %313 = vmatpush.bf16.msra.mxu0 %v248
    %314 = vmatpush.bf16.msra.mxu0 %v244
    %315 = vmatpush.bf16.msra.mxu0 %v240
    %316 = vmatpush.bf16.msra.mxu0 %v236
    %317 = vmatpush.bf16.msra.mxu0 %v232
    %318 = vmatpush.bf16.msra.mxu0 %v228
    %319 = vmatpush.bf16.msra.mxu0 %v224
    %320 = vmatmul.bf16.gmra.mxu0 %v93
    %v321 = vpop.f32.mrf.mxu0
    %v322 = vadd.f32 0.0, %v321
    %v323 = vpop.f32.mrf.mxu0
    %324 = vdwg.mxu0
    %325 = vmatpush.bf16.msra.mxu0 %v253
    %326 = vmatpush.bf16.msra.mxu0 %v249
    %327 = vmatpush.bf16.msra.mxu0 %v245
    %328 = vmatpush.bf16.msra.mxu0 %v241
    %329 = vmatpush.bf16.msra.mxu0 %v237
    %330 = vmatpush.bf16.msra.mxu0 %v233
    %331 = vmatpush.bf16.msra.mxu0 %v229
    %332 = vmatpush.bf16.msra.mxu0 %v225
    %333 = vmatmul.bf16.gmra.mxu0 %v93
    %v334 = vpop.f32.mrf.mxu0
    %v335 = vadd.f32 0.0, %v334
    %v336 = vpop.f32.mrf.mxu0
    %337 = vdwg.mxu0
    %v338 = vadd.f32 %v89, %v296
    %v339 = vadd.f32 %v90, %v309
    %v340 = vadd.f32 %v91, %v322
    %v341 = vadd.f32 %v92, %v335
    %v342 = vmul.f32 %v338, 0.5
    %v343 = vmul.f32 %v339, 0.5
    %v344 = vmul.f32 %v340, 0.5
    %v345 = vtanh.pop %v342
    %v346 = vtanh.pop %v343
    %v347 = vtanh.pop %v344
    %v348 = vadd.f32 %v345, 1.0
    %v349 = vadd.f32 %v346, 1.0
    %v350 = vadd.f32 %v347, 1.0
    %v351 = vmul.f32 %v348, 0.5
    %v352 = vmul.f32 %v349, 0.5
    %v353 = vmul.f32 %v350, 0.5
    %v354 = vtanh.pop %v341
    %v355 = vmul.f32 %v352, %v86
    %v356 = vmul.f32 %v351, %v354
    %v357 = vadd.f32 %v355, %v356
    %v358 = vtanh.pop %v357
    %v359 = vmul.f32 %v353, %v358
    %360 = vst [vmem:[#allocation2] sm:$0xff] %v359
    %361 = vst [vmem:[#allocation3] sm:$0xff] %v357
    %362 = vst [vmem:[#allocation12] sm:$0xff] %v359
    %v363 = vld [vmem:[#allocation2] sm:$0xff]
    %v364 = vld [vmem:[#allocation3] sm:$0xff]
    %s365 = scalar_lea.vmem [#allocation4], 16
    %v366 = vld [vmem:[%s365] sm:$0xff]
    %v367 = vld [vmem:[%s365 + $0x8] sm:$0xff]
    %v368 = vunpack.c.l.bf16 %v366
    %v369 = vunpack.c.h.bf16 %v366
    %v370 = vunpack.c.l.bf16 %v367
    %v371 = vunpack.c.h.bf16 %v367
    %v372 = vpack.c.bf16 %v363, %v363
    %v373 = vld [vmem:[#allocation10] sm:$0xff]
    %v374 = vld [vmem:[#allocation10 + $0x8] sm:$0xff]
    %v375 = vld [vmem:[#allocation10 + $0x10] sm:$0xff]
    %v376 = vld [vmem:[#allocation10 + $0x18] sm:$0xff]
    %v377 = vld [vmem:[#allocation10 + $0x20] sm:$0xff]
    %v378 = vld [vmem:[#allocation10 + $0x28] sm:$0xff]
    %v379 = vld [vmem:[#allocation10 + $0x30] sm:$0xff]
    %v380 = vld [vmem:[#allocation10 + $0x38] sm:$0xff]
    %v381 = vld [vmem:[#allocation10 + $0x40] sm:$0xff]
    %v382 = vld [vmem:[#allocation10 + $0x48] sm:$0xff]
    %v383 = vld [vmem:[#allocation10 + $0x50] sm:$0xff]
    %v384 = vld [vmem:[#allocation10 + $0x58] sm:$0xff]
    %v385 = vld [vmem:[#allocation10 + $0x60] sm:$0xff]
    %v386 = vld [vmem:[#allocation10 + $0x68] sm:$0xff]
    %v387 = vld [vmem:[#allocation10 + $0x70] sm:$0xff]
    %v388 = vld [vmem:[#allocation10 + $0x78] sm:$0xff]
    %v389 = vld [vmem:[#allocation10 + $0x80] sm:$0xff]
    %v390 = vld [vmem:[#allocation10 + $0x88] sm:$0xff]
    %v391 = vld [vmem:[#allocation10 + $0x90] sm:$0xff]
    %v392 = vld [vmem:[#allocation10 + $0x98] sm:$0xff]
    %v393 = vld [vmem:[#allocation10 + $0xa0] sm:$0xff]
    %v394 = vld [vmem:[#allocation10 + $0xa8] sm:$0xff]
    %v395 = vld [vmem:[#allocation10 + $0xb0] sm:$0xff]
    %v396 = vld [vmem:[#allocation10 + $0xb8] sm:$0xff]
    %v397 = vld [vmem:[#allocation10 + $0xc0] sm:$0xff]
    %v398 = vld [vmem:[#allocation10 + $0xc8] sm:$0xff]
    %v399 = vld [vmem:[#allocation10 + $0xd0] sm:$0xff]
    %v400 = vld [vmem:[#allocation10 + $0xd8] sm:$0xff]
    %v401 = vld [vmem:[#allocation10 + $0xe0] sm:$0xff]
    %v402 = vld [vmem:[#allocation10 + $0xe8] sm:$0xff]
    %v403 = vld [vmem:[#allocation10 + $0xf0] sm:$0xff]
    %v404 = vld [vmem:[#allocation10 + $0xf8] sm:$0xff]
    %v437 = vunpack.c.l.b16 %v373
    %v438 = vunpack.c.h.b16 %v373
    %v439 = vunpack.c.l.b16 %v374
    %v440 = vunpack.c.h.b16 %v374
    %v441 = vunpack.c.l.b16 %v375
    %v442 = vunpack.c.h.b16 %v375
    %v443 = vunpack.c.l.b16 %v376
    %v444 = vunpack.c.h.b16 %v376
    %v445 = vunpack.c.l.b16 %v377
    %v446 = vunpack.c.h.b16 %v377
    %v447 = vunpack.c.l.b16 %v378
    %v448 = vunpack.c.h.b16 %v378
    %v449 = vunpack.c.l.b16 %v379
    %v450 = vunpack.c.h.b16 %v379
    %v451 = vunpack.c.l.b16 %v380
    %v452 = vunpack.c.h.b16 %v380
    %v453 = vunpack.c.l.b16 %v381
    %v454 = vunpack.c.h.b16 %v381
    %v455 = vunpack.c.l.b16 %v382
    %v456 = vunpack.c.h.b16 %v382
    %v457 = vunpack.c.l.b16 %v383
    %v458 = vunpack.c.h.b16 %v383
    %v459 = vunpack.c.l.b16 %v384
    %v460 = vunpack.c.h.b16 %v384
    %v461 = vunpack.c.l.b16 %v385
    %v462 = vunpack.c.h.b16 %v385
    %v463 = vunpack.c.l.b16 %v386
    %v464 = vunpack.c.h.b16 %v386
    %v465 = vunpack.c.l.b16 %v387
    %v466 = vunpack.c.h.b16 %v387
    %v467 = vunpack.c.l.b16 %v388
    %v468 = vunpack.c.h.b16 %v388
    %v469 = vunpack.c.l.b16 %v389
    %v470 = vunpack.c.h.b16 %v389
    %v471 = vunpack.c.l.b16 %v390
    %v472 = vunpack.c.h.b16 %v390
    %v473 = vunpack.c.l.b16 %v391
    %v474 = vunpack.c.h.b16 %v391
    %v475 = vunpack.c.l.b16 %v392
    %v476 = vunpack.c.h.b16 %v392
    %v477 = vunpack.c.l.b16 %v393
    %v478 = vunpack.c.h.b16 %v393
    %v479 = vunpack.c.l.b16 %v394
    %v480 = vunpack.c.h.b16 %v394
    %v481 = vunpack.c.l.b16 %v395
    %v482 = vunpack.c.h.b16 %v395
    %v483 = vunpack.c.l.b16 %v396
    %v484 = vunpack.c.h.b16 %v396
    %v485 = vunpack.c.l.b16 %v397
    %v486 = vunpack.c.h.b16 %v397
    %v487 = vunpack.c.l.b16 %v398
    %v488 = vunpack.c.h.b16 %v398
    %v489 = vunpack.c.l.b16 %v399
    %v490 = vunpack.c.h.b16 %v399
    %v491 = vunpack.c.l.b16 %v400
    %v492 = vunpack.c.h.b16 %v400
    %v493 = vunpack.c.l.b16 %v401
    %v494 = vunpack.c.h.b16 %v401
    %v495 = vunpack.c.l.b16 %v402
    %v496 = vunpack.c.h.b16 %v402
    %v497 = vunpack.c.l.b16 %v403
    %v498 = vunpack.c.h.b16 %v403
    %v499 = vunpack.c.l.b16 %v404
    %v500 = vunpack.c.h.b16 %v404
    %v501 = vpack.c.b16 %v441, %v437
    %v502 = vpack.c.b16 %v442, %v438
    %v503 = vpack.c.b16 %v443, %v439
    %v504 = vpack.c.b16 %v444, %v440
    %v505 = vpack.c.b16 %v449, %v445
    %v506 = vpack.c.b16 %v450, %v446
    %v507 = vpack.c.b16 %v451, %v447
    %v508 = vpack.c.b16 %v452, %v448
    %v509 = vpack.c.b16 %v457, %v453
    %v510 = vpack.c.b16 %v458, %v454
    %v511 = vpack.c.b16 %v459, %v455
    %v512 = vpack.c.b16 %v460, %v456
    %v513 = vpack.c.b16 %v465, %v461
    %v514 = vpack.c.b16 %v466, %v462
    %v515 = vpack.c.b16 %v467, %v463
    %v516 = vpack.c.b16 %v468, %v464
    %v517 = vpack.c.b16 %v473, %v469
    %v518 = vpack.c.b16 %v474, %v470
    %v519 = vpack.c.b16 %v475, %v471
    %v520 = vpack.c.b16 %v476, %v472
    %v521 = vpack.c.b16 %v481, %v477
    %v522 = vpack.c.b16 %v482, %v478
    %v523 = vpack.c.b16 %v483, %v479
    %v524 = vpack.c.b16 %v484, %v480
    %v525 = vpack.c.b16 %v489, %v485
    %v526 = vpack.c.b16 %v490, %v486
    %v527 = vpack.c.b16 %v491, %v487
    %v528 = vpack.c.b16 %v492, %v488
    %v529 = vpack.c.b16 %v497, %v493
    %v530 = vpack.c.b16 %v498, %v494
    %v531 = vpack.c.b16 %v499, %v495
    %v532 = vpack.c.b16 %v500, %v496
    %565 = vmatpush.bf16.msra.mxu0 %v529
    %566 = vmatpush.bf16.msra.mxu0 %v525
    %567 = vmatpush.bf16.msra.mxu0 %v521
    %568 = vmatpush.bf16.msra.mxu0 %v517
    %569 = vmatpush.bf16.msra.mxu0 %v513
    %570 = vmatpush.bf16.msra.mxu0 %v509
    %571 = vmatpush.bf16.msra.mxu0 %v505
    %572 = vmatpush.bf16.msra.mxu0 %v501
    %573 = vmatmul.bf16.gmra.mxu0 %v372
    %v574 = vpop.f32.mrf.mxu0
    %v575 = vadd.f32 0.0, %v574
    %v576 = vpop.f32.mrf.mxu0
    %577 = vdwg.mxu0
    %578 = vmatpush.bf16.msra.mxu0 %v530
    %579 = vmatpush.bf16.msra.mxu0 %v526
    %580 = vmatpush.bf16.msra.mxu0 %v522
    %581 = vmatpush.bf16.msra.mxu0 %v518
    %582 = vmatpush.bf16.msra.mxu0 %v514
    %583 = vmatpush.bf16.msra.mxu0 %v510
    %584 = vmatpush.bf16.msra.mxu0 %v506
    %585 = vmatpush.bf16.msra.mxu0 %v502
    %586 = vmatmul.bf16.gmra.mxu0 %v372
    %v587 = vpop.f32.mrf.mxu0
    %v588 = vadd.f32 0.0, %v587
    %v589 = vpop.f32.mrf.mxu0
    %590 = vdwg.mxu0
    %591 = vmatpush.bf16.msra.mxu0 %v531
    %592 = vmatpush.bf16.msra.mxu0 %v527
    %593 = vmatpush.bf16.msra.mxu0 %v523
    %594 = vmatpush.bf16.msra.mxu0 %v519
    %595 = vmatpush.bf16.msra.mxu0 %v515
    %596 = vmatpush.bf16.msra.mxu0 %v511
    %597 = vmatpush.bf16.msra.mxu0 %v507
    %598 = vmatpush.bf16.msra.mxu0 %v503
    %599 = vmatmul.bf16.gmra.mxu0 %v372
    %v600 = vpop.f32.mrf.mxu0
    %v601 = vadd.f32 0.0, %v600
    %v602 = vpop.f32.mrf.mxu0
    %603 = vdwg.mxu0
    %604 = vmatpush.bf16.msra.mxu0 %v532
    %605 = vmatpush.bf16.msra.mxu0 %v528
    %606 = vmatpush.bf16.msra.mxu0 %v524
    %607 = vmatpush.bf16.msra.mxu0 %v520
    %608 = vmatpush.bf16.msra.mxu0 %v516
    %609 = vmatpush.bf16.msra.mxu0 %v512
    %610 = vmatpush.bf16.msra.mxu0 %v508
    %611 = vmatpush.bf16.msra.mxu0 %v504
    %612 = vmatmul.bf16.gmra.mxu0 %v372
    %v613 = vpop.f32.mrf.mxu0
    %v614 = vadd.f32 0.0, %v613
    %v615 = vpop.f32.mrf.mxu0
    %616 = vdwg.mxu0
    %v617 = vadd.f32 %v368, %v575
    %v618 = vadd.f32 %v369, %v588
    %v619 = vadd.f32 %v370, %v601
    %v620 = vadd.f32 %v371, %v614
    %v621 = vmul.f32 %v617, 0.5
    %v622 = vmul.f32 %v618, 0.5
    %v623 = vmul.f32 %v619, 0.5
    %v624 = vtanh.pop %v621
    %v625 = vtanh.pop %v622
    %v626 = vtanh.pop %v623
    %v627 = vadd.f32 %v624, 1.0
    %v628 = vadd.f32 %v625, 1.0
    %v629 = vadd.f32 %v626, 1.0
    %v630 = vmul.f32 %v627, 0.5
    %v631 = vmul.f32 %v628, 0.5
    %v632 = vmul.f32 %v629, 0.5
    %v633 = vtanh.pop %v620
    %v634 = vmul.f32 %v631, %v364
    %v635 = vmul.f32 %v630, %v633
    %v636 = vadd.f32 %v634, %v635
    %v637 = vtanh.pop %v636
    %v638 = vmul.f32 %v632, %v637
    %639 = vst [vmem:[#allocation2] sm:$0xff] %v638
    %640 = vst [vmem:[#allocation3] sm:$0xff] %v636
    %s641 = scalar_lea.vmem [#allocation12], 8
    %642 = vst [vmem:[%s641] sm:$0xff] %v638
    %v643 = vld [vmem:[#allocation2] sm:$0xff]
    %v644 = vld [vmem:[#allocation3] sm:$0xff]
    %s645 = scalar_lea.vmem [#allocation4], 32
    %v646 = vld [vmem:[%s645] sm:$0xff]
    %v647 = vld [vmem:[%s645 + $0x8] sm:$0xff]
    %v648 = vunpack.c.l.bf16 %v646
    %v649 = vunpack.c.h.bf16 %v646
    %v650 = vunpack.c.l.bf16 %v647
    %v651 = vunpack.c.h.bf16 %v647
    %v652 = vpack.c.bf16 %v643, %v643
    %v653 = vld [vmem:[#allocation10] sm:$0xff]
    %v654 = vld [vmem:[#allocation10 + $0x8] sm:$0xff]
    %v655 = vld [vmem:[#allocation10 + $0x10] sm:$0xff]
    %v656 = vld [vmem:[#allocation10 + $0x18] sm:$0xff]
    %v657 = vld [vmem:[#allocation10 + $0x20] sm:$0xff]
    %v658 = vld [vmem:[#allocation10 + $0x28] sm:$0xff]
    %v659 = vld [vmem:[#allocation10 + $0x30] sm:$0xff]
    %v660 = vld [vmem:[#allocation10 + $0x38] sm:$0xff]
    %v661 = vld [vmem:[#allocation10 + $0x40] sm:$0xff]
    %v662 = vld [vmem:[#allocation10 + $0x48] sm:$0xff]
    %v663 = vld [vmem:[#allocation10 + $0x50] sm:$0xff]
    %v664 = vld [vmem:[#allocation10 + $0x58] sm:$0xff]
    %v665 = vld [vmem:[#allocation10 + $0x60] sm:$0xff]
    %v666 = vld [vmem:[#allocation10 + $0x68] sm:$0xff]
    %v667 = vld [vmem:[#allocation10 + $0x70] sm:$0xff]
    %v668 = vld [vmem:[#allocation10 + $0x78] sm:$0xff]
    %v669 = vld [vmem:[#allocation10 + $0x80] sm:$0xff]
    %v670 = vld [vmem:[#allocation10 + $0x88] sm:$0xff]
    %v671 = vld [vmem:[#allocation10 + $0x90] sm:$0xff]
    %v672 = vld [vmem:[#allocation10 + $0x98] sm:$0xff]
    %v673 = vld [vmem:[#allocation10 + $0xa0] sm:$0xff]
    %v674 = vld [vmem:[#allocation10 + $0xa8] sm:$0xff]
    %v675 = vld [vmem:[#allocation10 + $0xb0] sm:$0xff]
    %v676 = vld [vmem:[#allocation10 + $0xb8] sm:$0xff]
    %v677 = vld [vmem:[#allocation10 + $0xc0] sm:$0xff]
    %v678 = vld [vmem:[#allocation10 + $0xc8] sm:$0xff]
    %v679 = vld [vmem:[#allocation10 + $0xd0] sm:$0xff]
    %v680 = vld [vmem:[#allocation10 + $0xd8] sm:$0xff]
    %v681 = vld [vmem:[#allocation10 + $0xe0] sm:$0xff]
    %v682 = vld [vmem:[#allocation10 + $0xe8] sm:$0xff]
    %v683 = vld [vmem:[#allocation10 + $0xf0] sm:$0xff]
    %v684 = vld [vmem:[#allocation10 + $0xf8] sm:$0xff]
    %v717 = vunpack.c.l.b16 %v653
    %v718 = vunpack.c.h.b16 %v653
    %v719 = vunpack.c.l.b16 %v654
    %v720 = vunpack.c.h.b16 %v654
    %v721 = vunpack.c.l.b16 %v655
    %v722 = vunpack.c.h.b16 %v655
    %v723 = vunpack.c.l.b16 %v656
    %v724 = vunpack.c.h.b16 %v656
    %v725 = vunpack.c.l.b16 %v657
    %v726 = vunpack.c.h.b16 %v657
    %v727 = vunpack.c.l.b16 %v658
    %v728 = vunpack.c.h.b16 %v658
    %v729 = vunpack.c.l.b16 %v659
    %v730 = vunpack.c.h.b16 %v659
    %v731 = vunpack.c.l.b16 %v660
    %v732 = vunpack.c.h.b16 %v660
    %v733 = vunpack.c.l.b16 %v661
    %v734 = vunpack.c.h.b16 %v661
    %v735 = vunpack.c.l.b16 %v662
    %v736 = vunpack.c.h.b16 %v662
    %v737 = vunpack.c.l.b16 %v663
    %v738 = vunpack.c.h.b16 %v663
    %v739 = vunpack.c.l.b16 %v664
    %v740 = vunpack.c.h.b16 %v664
    %v741 = vunpack.c.l.b16 %v665
    %v742 = vunpack.c.h.b16 %v665
    %v743 = vunpack.c.l.b16 %v666
    %v744 = vunpack.c.h.b16 %v666
    %v745 = vunpack.c.l.b16 %v667
    %v746 = vunpack.c.h.b16 %v667
    %v747 = vunpack.c.l.b16 %v668
    %v748 = vunpack.c.h.b16 %v668
    %v749 = vunpack.c.l.b16 %v669
    %v750 = vunpack.c.h.b16 %v669
    %v751 = vunpack.c.l.b16 %v670
    %v752 = vunpack.c.h.b16 %v670
    %v753 = vunpack.c.l.b16 %v671
    %v754 = vunpack.c.h.b16 %v671
    %v755 = vunpack.c.l.b16 %v672
    %v756 = vunpack.c.h.b16 %v672
    %v757 = vunpack.c.l.b16 %v673
    %v758 = vunpack.c.h.b16 %v673
    %v759 = vunpack.c.l.b16 %v674
    %v760 = vunpack.c.h.b16 %v674
    %v761 = vunpack.c.l.b16 %v675
    %v762 = vunpack.c.h.b16 %v675
    %v763 = vunpack.c.l.b16 %v676
    %v764 = vunpack.c.h.b16 %v676
    %v765 = vunpack.c.l.b16 %v677
    %v766 = vunpack.c.h.b16 %v677
    %v767 = vunpack.c.l.b16 %v678
    %v768 = vunpack.c.h.b16 %v678
    %v769 = vunpack.c.l.b16 %v679
    %v770 = vunpack.c.h.b16 %v679
    %v771 = vunpack.c.l.b16 %v680
    %v772 = vunpack.c.h.b16 %v680
    %v773 = vunpack.c.l.b16 %v681
    %v774 = vunpack.c.h.b16 %v681
    %v775 = vunpack.c.l.b16 %v682
    %v776 = vunpack.c.h.b16 %v682
    %v777 = vunpack.c.l.b16 %v683
    %v778 = vunpack.c.h.b16 %v683
    %v779 = vunpack.c.l.b16 %v684
    %v780 = vunpack.c.h.b16 %v684
    %v781 = vpack.c.b16 %v721, %v717
    %v782 = vpack.c.b16 %v722, %v718
    %v783 = vpack.c.b16 %v723, %v719
    %v784 = vpack.c.b16 %v724, %v720
    %v785 = vpack.c.b16 %v729, %v725
    %v786 = vpack.c.b16 %v730, %v726
    %v787 = vpack.c.b16 %v731, %v727
    %v788 = vpack.c.b16 %v732, %v728
    %v789 = vpack.c.b16 %v737, %v733
    %v790 = vpack.c.b16 %v738, %v734
    %v791 = vpack.c.b16 %v739, %v735
    %v792 = vpack.c.b16 %v740, %v736
    %v793 = vpack.c.b16 %v745, %v741
    %v794 = vpack.c.b16 %v746, %v742
    %v795 = vpack.c.b16 %v747, %v743
    %v796 = vpack.c.b16 %v748, %v744
    %v797 = vpack.c.b16 %v753, %v749
    %v798 = vpack.c.b16 %v754, %v750
    %v799 = vpack.c.b16 %v755, %v751
    %v800 = vpack.c.b16 %v756, %v752
    %v801 = vpack.c.b16 %v761, %v757
    %v802 = vpack.c.b16 %v762, %v758
    %v803 = vpack.c.b16 %v763, %v759
    %v804 = vpack.c.b16 %v764, %v760
    %v805 = vpack.c.b16 %v769, %v765
    %v806 = vpack.c.b16 %v770, %v766
    %v807 = vpack.c.b16 %v771, %v767
    %v808 = vpack.c.b16 %v772, %v768
    %v809 = vpack.c.b16 %v777, %v773
    %v810 = vpack.c.b16 %v778, %v774
    %v811 = vpack.c.b16 %v779, %v775
    %v812 = vpack.c.b16 %v780, %v776
    %845 = vmatpush.bf16.msra.mxu0 %v809
    %846 = vmatpush.bf16.msra.mxu0 %v805
    %847 = vmatpush.bf16.msra.mxu0 %v801
    %848 = vmatpush.bf16.msra.mxu0 %v797
    %849 = vmatpush.bf16.msra.mxu0 %v793
    %850 = vmatpush.bf16.msra.mxu0 %v789
    %851 = vmatpush.bf16.msra.mxu0 %v785
    %852 = vmatpush.bf16.msra.mxu0 %v781
    %853 = vmatmul.bf16.gmra.mxu0 %v652
    %v854 = vpop.f32.mrf.mxu0
    %v855 = vadd.f32 0.0, %v854
    %v856 = vpop.f32.mrf.mxu0
    %857 = vdwg.mxu0
    %858 = vmatpush.bf16.msra.mxu0 %v810
    %859 = vmatpush.bf16.msra.mxu0 %v806
    %860 = vmatpush.bf16.msra.mxu0 %v802
    %861 = vmatpush.bf16.msra.mxu0 %v798
    %862 = vmatpush.bf16.msra.mxu0 %v794
    %863 = vmatpush.bf16.msra.mxu0 %v790
    %864 = vmatpush.bf16.msra.mxu0 %v786
    %865 = vmatpush.bf16.msra.mxu0 %v782
    %866 = vmatmul.bf16.gmra.mxu0 %v652
    %v867 = vpop.f32.mrf.mxu0
    %v868 = vadd.f32 0.0, %v867
    %v869 = vpop.f32.mrf.mxu0
    %870 = vdwg.mxu0
    %871 = vmatpush.bf16.msra.mxu0 %v811
    %872 = vmatpush.bf16.msra.mxu0 %v807
    %873 = vmatpush.bf16.msra.mxu0 %v803
    %874 = vmatpush.bf16.msra.mxu0 %v799
    %875 = vmatpush.bf16.msra.mxu0 %v795
    %876 = vmatpush.bf16.msra.mxu0 %v791
    %877 = vmatpush.bf16.msra.mxu0 %v787
    %878 = vmatpush.bf16.msra.mxu0 %v783
    %879 = vmatmul.bf16.gmra.mxu0 %v652
    %v880 = vpop.f32.mrf.mxu0
    %v881 = vadd.f32 0.0, %v880
    %v882 = vpop.f32.mrf.mxu0
    %883 = vdwg.mxu0
    %884 = vmatpush.bf16.msra.mxu0 %v812
    %885 = vmatpush.bf16.msra.mxu0 %v808
    %886 = vmatpush.bf16.msra.mxu0 %v804
    %887 = vmatpush.bf16.msra.mxu0 %v800
    %888 = vmatpush.bf16.msra.mxu0 %v796
    %889 = vmatpush.bf16.msra.mxu0 %v792
    %890 = vmatpush.bf16.msra.mxu0 %v788
    %891 = vmatpush.bf16.msra.mxu0 %v784
    %892 = vmatmul.bf16.gmra.mxu0 %v652
    %v893 = vpop.f32.mrf.mxu0
    %v894 = vadd.f32 0.0, %v893
    %v895 = vpop.f32.mrf.mxu0
    %896 = vdwg.mxu0
    %v897 = vadd.f32 %v648, %v855
    %v898 = vadd.f32 %v649, %v868
    %v899 = vadd.f32 %v650, %v881
    %v900 = vadd.f32 %v651, %v894
    %v901 = vmul.f32 %v897, 0.5
    %v902 = vmul.f32 %v898, 0.5
    %v903 = vmul.f32 %v899, 0.5
    %v904 = vtanh.pop %v901
    %v905 = vtanh.pop %v902
    %v906 = vtanh.pop %v903
    %v907 = vadd.f32 %v904, 1.0
    %v908 = vadd.f32 %v905, 1.0
    %v909 = vadd.f32 %v906, 1.0
    %v910 = vmul.f32 %v907, 0.5
    %v911 = vmul.f32 %v908, 0.5
    %v912 = vmul.f32 %v909, 0.5
    %v913 = vtanh.pop %v900
    %v914 = vmul.f32 %v911, %v644
    %v915 = vmul.f32 %v910, %v913
    %v916 = vadd.f32 %v914, %v915
    %v917 = vtanh.pop %v916
    %v918 = vmul.f32 %v912, %v917
    %919 = vst [vmem:[#allocation2] sm:$0xff] %v918
    %920 = vst [vmem:[#allocation3] sm:$0xff] %v916
    %s921 = scalar_lea.vmem [#allocation12], 16
    %922 = vst [vmem:[%s921] sm:$0xff] %v918
    %v923 = vld [vmem:[#allocation2] sm:$0xff]
    %v924 = vld [vmem:[#allocation3] sm:$0xff]
    %s925 = scalar_lea.vmem [#allocation4], 48
    %v926 = vld [vmem:[%s925] sm:$0xff]
    %v927 = vld [vmem:[%s925 + $0x8] sm:$0xff]
    %v928 = vunpack.c.l.bf16 %v926
    %v929 = vunpack.c.h.bf16 %v926
    %v930 = vunpack.c.l.bf16 %v927
    %v931 = vunpack.c.h.bf16 %v927
    %v932 = vpack.c.bf16 %v923, %v923
    %v933 = vld [vmem:[#allocation10] sm:$0xff]
    %v934 = vld [vmem:[#allocation10 + $0x8] sm:$0xff]
    %v935 = vld [vmem:[#allocation10 + $0x10] sm:$0xff]
    %v936 = vld [vmem:[#allocation10 + $0x18] sm:$0xff]
    %v937 = vld [vmem:[#allocation10 + $0x20] sm:$0xff]
    %v938 = vld [vmem:[#allocation10 + $0x28] sm:$0xff]
    %v939 = vld [vmem:[#allocation10 + $0x30] sm:$0xff]
    %v940 = vld [vmem:[#allocation10 + $0x38] sm:$0xff]
    %v941 = vld [vmem:[#allocation10 + $0x40] sm:$0xff]
    %v942 = vld [vmem:[#allocation10 + $0x48] sm:$0xff]
    %v943 = vld [vmem:[#allocation10 + $0x50] sm:$0xff]
    %v944 = vld [vmem:[#allocation10 + $0x58] sm:$0xff]
    %v945 = vld [vmem:[#allocation10 + $0x60] sm:$0xff]
    %v946 = vld [vmem:[#allocation10 + $0x68] sm:$0xff]
    %v947 = vld [vmem:[#allocation10 + $0x70] sm:$0xff]
    %v948 = vld [vmem:[#allocation10 + $0x78] sm:$0xff]
    %v949 = vld [vmem:[#allocation10 + $0x80] sm:$0xff]
    %v950 = vld [vmem:[#allocation10 + $0x88] sm:$0xff]
    %v951 = vld [vmem:[#allocation10 + $0x90] sm:$0xff]
    %v952 = vld [vmem:[#allocation10 + $0x98] sm:$0xff]
    %v953 = vld [vmem:[#allocation10 + $0xa0] sm:$0xff]
    %v954 = vld [vmem:[#allocation10 + $0xa8] sm:$0xff]
    %v955 = vld [vmem:[#allocation10 + $0xb0] sm:$0xff]
    %v956 = vld [vmem:[#allocation10 + $0xb8] sm:$0xff]
    %v957 = vld [vmem:[#allocation10 + $0xc0] sm:$0xff]
    %v958 = vld [vmem:[#allocation10 + $0xc8] sm:$0xff]
    %v959 = vld [vmem:[#allocation10 + $0xd0] sm:$0xff]
    %v960 = vld [vmem:[#allocation10 + $0xd8] sm:$0xff]
    %v961 = vld [vmem:[#allocation10 + $0xe0] sm:$0xff]
    %v962 = vld [vmem:[#allocation10 + $0xe8] sm:$0xff]
    %v963 = vld [vmem:[#allocation10 + $0xf0] sm:$0xff]
    %v964 = vld [vmem:[#allocation10 + $0xf8] sm:$0xff]
    %v997 = vunpack.c.l.b16 %v933
    %v998 = vunpack.c.h.b16 %v933
    %v999 = vunpack.c.l.b16 %v934
    %v1000 = vunpack.c.h.b16 %v934
    %v1001 = vunpack.c.l.b16 %v935
    %v1002 = vunpack.c.h.b16 %v935
    %v1003 = vunpack.c.l.b16 %v936
    %v1004 = vunpack.c.h.b16 %v936
    %v1005 = vunpack.c.l.b16 %v937
    %v1006 = vunpack.c.h.b16 %v937
    %v1007 = vunpack.c.l.b16 %v938
    %v1008 = vunpack.c.h.b16 %v938
    %v1009 = vunpack.c.l.b16 %v939
    %v1010 = vunpack.c.h.b16 %v939
    %v1011 = vunpack.c.l.b16 %v940
    %v1012 = vunpack.c.h.b16 %v940
    %v1013 = vunpack.c.l.b16 %v941
    %v1014 = vunpack.c.h.b16 %v941
    %v1015 = vunpack.c.l.b16 %v942
    %v1016 = vunpack.c.h.b16 %v942
    %v1017 = vunpack.c.l.b16 %v943
    %v1018 = vunpack.c.h.b16 %v943
    %v1019 = vunpack.c.l.b16 %v944
    %v1020 = vunpack.c.h.b16 %v944
    %v1021 = vunpack.c.l.b16 %v945
    %v1022 = vunpack.c.h.b16 %v945
    %v1023 = vunpack.c.l.b16 %v946
    %v1024 = vunpack.c.h.b16 %v946
    %v1025 = vunpack.c.l.b16 %v947
    %v1026 = vunpack.c.h.b16 %v947
    %v1027 = vunpack.c.l.b16 %v948
    %v1028 = vunpack.c.h.b16 %v948
    %v1029 = vunpack.c.l.b16 %v949
    %v1030 = vunpack.c.h.b16 %v949
    %v1031 = vunpack.c.l.b16 %v950
    %v1032 = vunpack.c.h.b16 %v950
    %v1033 = vunpack.c.l.b16 %v951
    %v1034 = vunpack.c.h.b16 %v951
    %v1035 = vunpack.c.l.b16 %v952
    %v1036 = vunpack.c.h.b16 %v952
    %v1037 = vunpack.c.l.b16 %v953
    %v1038 = vunpack.c.h.b16 %v953
    %v1039 = vunpack.c.l.b16 %v954
    %v1040 = vunpack.c.h.b16 %v954
    %v1041 = vunpack.c.l.b16 %v955
    %v1042 = vunpack.c.h.b16 %v955
    %v1043 = vunpack.c.l.b16 %v956
    %v1044 = vunpack.c.h.b16 %v956
    %v1045 = vunpack.c.l.b16 %v957
    %v1046 = vunpack.c.h.b16 %v957
    %v1047 = vunpack.c.l.b16 %v958
    %v1048 = vunpack.c.h.b16 %v958
    %v1049 = vunpack.c.l.b16 %v959
    %v1050 = vunpack.c.h.b16 %v959
    %v1051 = vunpack.c.l.b16 %v960
    %v1052 = vunpack.c.h.b16 %v960
    %v1053 = vunpack.c.l.b16 %v961
    %v1054 = vunpack.c.h.b16 %v961
    %v1055 = vunpack.c.l.b16 %v962
    %v1056 = vunpack.c.h.b16 %v962
    %v1057 = vunpack.c.l.b16 %v963
    %v1058 = vunpack.c.h.b16 %v963
    %v1059 = vunpack.c.l.b16 %v964
    %v1060 = vunpack.c.h.b16 %v964
    %v1061 = vpack.c.b16 %v1001, %v997
    %v1062 = vpack.c.b16 %v1002, %v998
    %v1063 = vpack.c.b16 %v1003, %v999
    %v1064 = vpack.c.b16 %v1004, %v1000
    %v1065 = vpack.c.b16 %v1009, %v1005
    %v1066 = vpack.c.b16 %v1010, %v1006
    %v1067 = vpack.c.b16 %v1011, %v1007
    %v1068 = vpack.c.b16 %v1012, %v1008
    %v1069 = vpack.c.b16 %v1017, %v1013
    %v1070 = vpack.c.b16 %v1018, %v1014
    %v1071 = vpack.c.b16 %v1019, %v1015
    %v1072 = vpack.c.b16 %v1020, %v1016
    %v1073 = vpack.c.b16 %v1025, %v1021
    %v1074 = vpack.c.b16 %v1026, %v1022
    %v1075 = vpack.c.b16 %v1027, %v1023
    %v1076 = vpack.c.b16 %v1028, %v1024
    %v1077 = vpack.c.b16 %v1033, %v1029
    %v1078 = vpack.c.b16 %v1034, %v1030
    %v1079 = vpack.c.b16 %v1035, %v1031
    %v1080 = vpack.c.b16 %v1036, %v1032
    %v1081 = vpack.c.b16 %v1041, %v1037
    %v1082 = vpack.c.b16 %v1042, %v1038
    %v1083 = vpack.c.b16 %v1043, %v1039
    %v1084 = vpack.c.b16 %v1044, %v1040
    %v1085 = vpack.c.b16 %v1049, %v1045
    %v1086 = vpack.c.b16 %v1050, %v1046
    %v1087 = vpack.c.b16 %v1051, %v1047
    %v1088 = vpack.c.b16 %v1052, %v1048
    %v1089 = vpack.c.b16 %v1057, %v1053
    %v1090 = vpack.c.b16 %v1058, %v1054
    %v1091 = vpack.c.b16 %v1059, %v1055
    %v1092 = vpack.c.b16 %v1060, %v1056
    %1125 = vmatpush.bf16.msra.mxu0 %v1089
    %1126 = vmatpush.bf16.msra.mxu0 %v1085
    %1127 = vmatpush.bf16.msra.mxu0 %v1081
    %1128 = vmatpush.bf16.msra.mxu0 %v1077
    %1129 = vmatpush.bf16.msra.mxu0 %v1073
    %1130 = vmatpush.bf16.msra.mxu0 %v1069
    %1131 = vmatpush.bf16.msra.mxu0 %v1065
    %1132 = vmatpush.bf16.msra.mxu0 %v1061
    %1133 = vmatmul.bf16.gmra.mxu0 %v932
    %v1134 = vpop.f32.mrf.mxu0
    %v1135 = vadd.f32 0.0, %v1134
    %v1136 = vpop.f32.mrf.mxu0
    %1137 = vdwg.mxu0
    %1138 = vmatpush.bf16.msra.mxu0 %v1090
    %1139 = vmatpush.bf16.msra.mxu0 %v1086
    %1140 = vmatpush.bf16.msra.mxu0 %v1082
    %1141 = vmatpush.bf16.msra.mxu0 %v1078
    %1142 = vmatpush.bf16.msra.mxu0 %v1074
    %1143 = vmatpush.bf16.msra.mxu0 %v1070
    %1144 = vmatpush.bf16.msra.mxu0 %v1066
    %1145 = vmatpush.bf16.msra.mxu0 %v1062
    %1146 = vmatmul.bf16.gmra.mxu0 %v932
    %v1147 = vpop.f32.mrf.mxu0
    %v1148 = vadd.f32 0.0, %v1147
    %v1149 = vpop.f32.mrf.mxu0
    %1150 = vdwg.mxu0
    %1151 = vmatpush.bf16.msra.mxu0 %v1091
    %1152 = vmatpush.bf16.msra.mxu0 %v1087
    %1153 = vmatpush.bf16.msra.mxu0 %v1083
    %1154 = vmatpush.bf16.msra.mxu0 %v1079
    %1155 = vmatpush.bf16.msra.mxu0 %v1075
    %1156 = vmatpush.bf16.msra.mxu0 %v1071
    %1157 = vmatpush.bf16.msra.mxu0 %v1067
    %1158 = vmatpush.bf16.msra.mxu0 %v1063
    %1159 = vmatmul.bf16.gmra.mxu0 %v932
    %v1160 = vpop.f32.mrf.mxu0
    %v1161 = vadd.f32 0.0, %v1160
    %v1162 = vpop.f32.mrf.mxu0
    %1163 = vdwg.mxu0
    %1164 = vmatpush.bf16.msra.mxu0 %v1092
    %1165 = vmatpush.bf16.msra.mxu0 %v1088
    %1166 = vmatpush.bf16.msra.mxu0 %v1084
    %1167 = vmatpush.bf16.msra.mxu0 %v1080
    %1168 = vmatpush.bf16.msra.mxu0 %v1076
    %1169 = vmatpush.bf16.msra.mxu0 %v1072
    %1170 = vmatpush.bf16.msra.mxu0 %v1068
    %1171 = vmatpush.bf16.msra.mxu0 %v1064
    %1172 = vmatmul.bf16.gmra.mxu0 %v932
    %v1173 = vpop.f32.mrf.mxu0
    %v1174 = vadd.f32 0.0, %v1173
    %v1175 = vpop.f32.mrf.mxu0
    %1176 = vdwg.mxu0
    %v1177 = vadd.f32 %v928, %v1135
    %v1178 = vadd.f32 %v929, %v1148
    %v1179 = vadd.f32 %v930, %v1161
    %v1180 = vadd.f32 %v931, %v1174
    %v1181 = vmul.f32 %v1177, 0.5
    %v1182 = vmul.f32 %v1178, 0.5
    %v1183 = vmul.f32 %v1179, 0.5
    %v1184 = vtanh.pop %v1181
    %v1185 = vtanh.pop %v1182
    %v1186 = vtanh.pop %v1183
    %v1187 = vadd.f32 %v1184, 1.0
    %v1188 = vadd.f32 %v1185, 1.0
    %v1189 = vadd.f32 %v1186, 1.0
    %v1190 = vmul.f32 %v1187, 0.5
    %v1191 = vmul.f32 %v1188, 0.5
    %v1192 = vmul.f32 %v1189, 0.5
    %v1193 = vtanh.pop %v1180
    %v1194 = vmul.f32 %v1191, %v924
    %v1195 = vmul.f32 %v1190, %v1193
    %v1196 = vadd.f32 %v1194, %v1195
    %v1197 = vtanh.pop %v1196
    %v1198 = vmul.f32 %v1192, %v1197
    %1199 = vst [vmem:[#allocation2] sm:$0xff] %v1198
    %1200 = vst [vmem:[#allocation3] sm:$0xff] %v1196
    %s1201 = scalar_lea.vmem [#allocation12], 24
    %1202 = vst [vmem:[%s1201] sm:$0xff] %v1198
    %v1203 = vld [vmem:[#allocation2] sm:$0xff]
    %v1204 = vld [vmem:[#allocation3] sm:$0xff]
    %s1205 = scalar_lea.vmem [#allocation4], 64
    %v1206 = vld [vmem:[%s1205] sm:$0xff]
    %v1207 = vld [vmem:[%s1205 + $0x8] sm:$0xff]
    %v1208 = vunpack.c.l.bf16 %v1206
    %v1209 = vunpack.c.h.bf16 %v1206
    %v1210 = vunpack.c.l.bf16 %v1207
    %v1211 = vunpack.c.h.bf16 %v1207
    %v1212 = vpack.c.bf16 %v1203, %v1203
    %v1213 = vld [vmem:[#allocation10] sm:$0xff]
    %v1214 = vld [vmem:[#allocation10 + $0x8] sm:$0xff]
    %v1215 = vld [vmem:[#allocation10 + $0x10] sm:$0xff]
    %v1216 = vld [vmem:[#allocation10 + $0x18] sm:$0xff]
    %v1217 = vld [vmem:[#allocation10 + $0x20] sm:$0xff]
    %v1218 = vld [vmem:[#allocation10 + $0x28] sm:$0xff]
    %v1219 = vld [vmem:[#allocation10 + $0x30] sm:$0xff]
    %v1220 = vld [vmem:[#allocation10 + $0x38] sm:$0xff]
    %v1221 = vld [vmem:[#allocation10 + $0x40] sm:$0xff]
    %v1222 = vld [vmem:[#allocation10 + $0x48] sm:$0xff]
    %v1223 = vld [vmem:[#allocation10 + $0x50] sm:$0xff]
    %v1224 = vld [vmem:[#allocation10 + $0x58] sm:$0xff]
    %v1225 = vld [vmem:[#allocation10 + $0x60] sm:$0xff]
    %v1226 = vld [vmem:[#allocation10 + $0x68] sm:$0xff]
    %v1227 = vld [vmem:[#allocation10 + $0x70] sm:$0xff]
    %v1228 = vld [vmem:[#allocation10 + $0x78] sm:$0xff]
    %v1229 = vld [vmem:[#allocation10 + $0x80] sm:$0xff]
    %v1230 = vld [vmem:[#allocation10 + $0x88] sm:$0xff]
    %v1231 = vld [vmem:[#allocation10 + $0x90] sm:$0xff]
    %v1232 = vld [vmem:[#allocation10 + $0x98] sm:$0xff]
    %v1233 = vld [vmem:[#allocation10 + $0xa0] sm:$0xff]
    %v1234 = vld [vmem:[#allocation10 + $0xa8] sm:$0xff]
    %v1235 = vld [vmem:[#allocation10 + $0xb0] sm:$0xff]
    %v1236 = vld [vmem:[#allocation10 + $0xb8] sm:$0xff]
    %v1237 = vld [vmem:[#allocation10 + $0xc0] sm:$0xff]
    %v1238 = vld [vmem:[#allocation10 + $0xc8] sm:$0xff]
    %v1239 = vld [vmem:[#allocation10 + $0xd0] sm:$0xff]
    %v1240 = vld [vmem:[#allocation10 + $0xd8] sm:$0xff]
    %v1241 = vld [vmem:[#allocation10 + $0xe0] sm:$0xff]
    %v1242 = vld [vmem:[#allocation10 + $0xe8] sm:$0xff]
    %v1243 = vld [vmem:[#allocation10 + $0xf0] sm:$0xff]
    %v1244 = vld [vmem:[#allocation10 + $0xf8] sm:$0xff]
    %v1277 = vunpack.c.l.b16 %v1213
    %v1278 = vunpack.c.h.b16 %v1213
    %v1279 = vunpack.c.l.b16 %v1214
    %v1280 = vunpack.c.h.b16 %v1214
    %v1281 = vunpack.c.l.b16 %v1215
    %v1282 = vunpack.c.h.b16 %v1215
    %v1283 = vunpack.c.l.b16 %v1216
    %v1284 = vunpack.c.h.b16 %v1216
    %v1285 = vunpack.c.l.b16 %v1217
    %v1286 = vunpack.c.h.b16 %v1217
    %v1287 = vunpack.c.l.b16 %v1218
    %v1288 = vunpack.c.h.b16 %v1218
    %v1289 = vunpack.c.l.b16 %v1219
    %v1290 = vunpack.c.h.b16 %v1219
    %v1291 = vunpack.c.l.b16 %v1220
    %v1292 = vunpack.c.h.b16 %v1220
    %v1293 = vunpack.c.l.b16 %v1221
    %v1294 = vunpack.c.h.b16 %v1221
    %v1295 = vunpack.c.l.b16 %v1222
    %v1296 = vunpack.c.h.b16 %v1222
    %v1297 = vunpack.c.l.b16 %v1223
    %v1298 = vunpack.c.h.b16 %v1223
    %v1299 = vunpack.c.l.b16 %v1224
    %v1300 = vunpack.c.h.b16 %v1224
    %v1301 = vunpack.c.l.b16 %v1225
    %v1302 = vunpack.c.h.b16 %v1225
    %v1303 = vunpack.c.l.b16 %v1226
    %v1304 = vunpack.c.h.b16 %v1226
    %v1305 = vunpack.c.l.b16 %v1227
    %v1306 = vunpack.c.h.b16 %v1227
    %v1307 = vunpack.c.l.b16 %v1228
    %v1308 = vunpack.c.h.b16 %v1228
    %v1309 = vunpack.c.l.b16 %v1229
    %v1310 = vunpack.c.h.b16 %v1229
    %v1311 = vunpack.c.l.b16 %v1230
    %v1312 = vunpack.c.h.b16 %v1230
    %v1313 = vunpack.c.l.b16 %v1231
    %v1314 = vunpack.c.h.b16 %v1231
    %v1315 = vunpack.c.l.b16 %v1232
    %v1316 = vunpack.c.h.b16 %v1232
    %v1317 = vunpack.c.l.b16 %v1233
    %v1318 = vunpack.c.h.b16 %v1233
    %v1319 = vunpack.c.l.b16 %v1234
    %v1320 = vunpack.c.h.b16 %v1234
    %v1321 = vunpack.c.l.b16 %v1235
    %v1322 = vunpack.c.h.b16 %v1235
    %v1323 = vunpack.c.l.b16 %v1236
    %v1324 = vunpack.c.h.b16 %v1236
    %v1325 = vunpack.c.l.b16 %v1237
    %v1326 = vunpack.c.h.b16 %v1237
    %v1327 = vunpack.c.l.b16 %v1238
    %v1328 = vunpack.c.h.b16 %v1238
    %v1329 = vunpack.c.l.b16 %v1239
    %v1330 = vunpack.c.h.b16 %v1239
    %v1331 = vunpack.c.l.b16 %v1240
    %v1332 = vunpack.c.h.b16 %v1240
    %v1333 = vunpack.c.l.b16 %v1241
    %v1334 = vunpack.c.h.b16 %v1241
    %v1335 = vunpack.c.l.b16 %v1242
    %v1336 = vunpack.c.h.b16 %v1242
    %v1337 = vunpack.c.l.b16 %v1243
    %v1338 = vunpack.c.h.b16 %v1243
    %v1339 = vunpack.c.l.b16 %v1244
    %v1340 = vunpack.c.h.b16 %v1244
    %v1341 = vpack.c.b16 %v1281, %v1277
    %v1342 = vpack.c.b16 %v1282, %v1278
    %v1343 = vpack.c.b16 %v1283, %v1279
    %v1344 = vpack.c.b16 %v1284, %v1280
    %v1345 = vpack.c.b16 %v1289, %v1285
    %v1346 = vpack.c.b16 %v1290, %v1286
    %v1347 = vpack.c.b16 %v1291, %v1287
    %v1348 = vpack.c.b16 %v1292, %v1288
    %v1349 = vpack.c.b16 %v1297, %v1293
    %v1350 = vpack.c.b16 %v1298, %v1294
    %v1351 = vpack.c.b16 %v1299, %v1295
    %v1352 = vpack.c.b16 %v1300, %v1296
    %v1353 = vpack.c.b16 %v1305, %v1301
    %v1354 = vpack.c.b16 %v1306, %v1302
    %v1355 = vpack.c.b16 %v1307, %v1303
    %v1356 = vpack.c.b16 %v1308, %v1304
    %v1357 = vpack.c.b16 %v1313, %v1309
    %v1358 = vpack.c.b16 %v1314, %v1310
    %v1359 = vpack.c.b16 %v1315, %v1311
    %v1360 = vpack.c.b16 %v1316, %v1312
    %v1361 = vpack.c.b16 %v1321, %v1317
    %v1362 = vpack.c.b16 %v1322, %v1318
    %v1363 = vpack.c.b16 %v1323, %v1319
    %v1364 = vpack.c.b16 %v1324, %v1320
    %v1365 = vpack.c.b16 %v1329, %v1325
    %v1366 = vpack.c.b16 %v1330, %v1326
    %v1367 = vpack.c.b16 %v1331, %v1327
    %v1368 = vpack.c.b16 %v1332, %v1328
    %v1369 = vpack.c.b16 %v1337, %v1333
    %v1370 = vpack.c.b16 %v1338, %v1334
    %v1371 = vpack.c.b16 %v1339, %v1335
    %v1372 = vpack.c.b16 %v1340, %v1336
    %1405 = vmatpush.bf16.msra.mxu0 %v1369
    %1406 = vmatpush.bf16.msra.mxu0 %v1365
    %1407 = vmatpush.bf16.msra.mxu0 %v1361
    %1408 = vmatpush.bf16.msra.mxu0 %v1357
    %1409 = vmatpush.bf16.msra.mxu0 %v1353
    %1410 = vmatpush.bf16.msra.mxu0 %v1349
    %1411 = vmatpush.bf16.msra.mxu0 %v1345
    %1412 = vmatpush.bf16.msra.mxu0 %v1341
    %1413 = vmatmul.bf16.gmra.mxu0 %v1212
    %v1414 = vpop.f32.mrf.mxu0
    %v1415 = vadd.f32 0.0, %v1414
    %v1416 = vpop.f32.mrf.mxu0
    %1417 = vdwg.mxu0
    %1418 = vmatpush.bf16.msra.mxu0 %v1370
    %1419 = vmatpush.bf16.msra.mxu0 %v1366
    %1420 = vmatpush.bf16.msra.mxu0 %v1362
    %1421 = vmatpush.bf16.msra.mxu0 %v1358
    %1422 = vmatpush.bf16.msra.mxu0 %v1354
    %1423 = vmatpush.bf16.msra.mxu0 %v1350
    %1424 = vmatpush.bf16.msra.mxu0 %v1346
    %1425 = vmatpush.bf16.msra.mxu0 %v1342
    %1426 = vmatmul.bf16.gmra.mxu0 %v1212
    %v1427 = vpop.f32.mrf.mxu0
    %v1428 = vadd.f32 0.0, %v1427
    %v1429 = vpop.f32.mrf.mxu0
    %1430 = vdwg.mxu0
    %1431 = vmatpush.bf16.msra.mxu0 %v1371
    %1432 = vmatpush.bf16.msra.mxu0 %v1367
    %1433 = vmatpush.bf16.msra.mxu0 %v1363
    %1434 = vmatpush.bf16.msra.mxu0 %v1359
    %1435 = vmatpush.bf16.msra.mxu0 %v1355
    %1436 = vmatpush.bf16.msra.mxu0 %v1351
    %1437 = vmatpush.bf16.msra.mxu0 %v1347
    %1438 = vmatpush.bf16.msra.mxu0 %v1343
    %1439 = vmatmul.bf16.gmra.mxu0 %v1212
    %v1440 = vpop.f32.mrf.mxu0
    %v1441 = vadd.f32 0.0, %v1440
    %v1442 = vpop.f32.mrf.mxu0
    %1443 = vdwg.mxu0
    %1444 = vmatpush.bf16.msra.mxu0 %v1372
    %1445 = vmatpush.bf16.msra.mxu0 %v1368
    %1446 = vmatpush.bf16.msra.mxu0 %v1364
    %1447 = vmatpush.bf16.msra.mxu0 %v1360
    %1448 = vmatpush.bf16.msra.mxu0 %v1356
    %1449 = vmatpush.bf16.msra.mxu0 %v1352
    %1450 = vmatpush.bf16.msra.mxu0 %v1348
    %1451 = vmatpush.bf16.msra.mxu0 %v1344
    %1452 = vmatmul.bf16.gmra.mxu0 %v1212
    %v1453 = vpop.f32.mrf.mxu0
    %v1454 = vadd.f32 0.0, %v1453
    %v1455 = vpop.f32.mrf.mxu0
    %1456 = vdwg.mxu0
    %v1457 = vadd.f32 %v1208, %v1415
    %v1458 = vadd.f32 %v1209, %v1428
    %v1459 = vadd.f32 %v1210, %v1441
    %v1460 = vadd.f32 %v1211, %v1454
    %v1461 = vmul.f32 %v1457, 0.5
    %v1462 = vmul.f32 %v1458, 0.5
    %v1463 = vmul.f32 %v1459, 0.5
    %v1464 = vtanh.pop %v1461
    %v1465 = vtanh.pop %v1462
    %v1466 = vtanh.pop %v1463
    %v1467 = vadd.f32 %v1464, 1.0
    %v1468 = vadd.f32 %v1465, 1.0
    %v1469 = vadd.f32 %v1466, 1.0
    %v1470 = vmul.f32 %v1467, 0.5
    %v1471 = vmul.f32 %v1468, 0.5
    %v1472 = vmul.f32 %v1469, 0.5
    %v1473 = vtanh.pop %v1460
    %v1474 = vmul.f32 %v1471, %v1204
    %v1475 = vmul.f32 %v1470, %v1473
    %v1476 = vadd.f32 %v1474, %v1475
    %v1477 = vtanh.pop %v1476
    %v1478 = vmul.f32 %v1472, %v1477
    %1479 = vst [vmem:[#allocation2] sm:$0xff] %v1478
    %1480 = vst [vmem:[#allocation3] sm:$0xff] %v1476
    %s1481 = scalar_lea.vmem [#allocation12], 32
    %1482 = vst [vmem:[%s1481] sm:$0xff] %v1478
    %v1483 = vld [vmem:[#allocation2] sm:$0xff]
    %v1484 = vld [vmem:[#allocation3] sm:$0xff]
    %s1485 = scalar_lea.vmem [#allocation4], 80
    %v1486 = vld [vmem:[%s1485] sm:$0xff]
    %v1487 = vld [vmem:[%s1485 + $0x8] sm:$0xff]
    %v1488 = vunpack.c.l.bf16 %v1486
    %v1489 = vunpack.c.h.bf16 %v1486
    %v1490 = vunpack.c.l.bf16 %v1487
    %v1491 = vunpack.c.h.bf16 %v1487
    %v1492 = vpack.c.bf16 %v1483, %v1483
    %v1493 = vld [vmem:[#allocation10] sm:$0xff]
    %v1494 = vld [vmem:[#allocation10 + $0x8] sm:$0xff]
    %v1495 = vld [vmem:[#allocation10 + $0x10] sm:$0xff]
    %v1496 = vld [vmem:[#allocation10 + $0x18] sm:$0xff]
    %v1497 = vld [vmem:[#allocation10 + $0x20] sm:$0xff]
    %v1498 = vld [vmem:[#allocation10 + $0x28] sm:$0xff]
    %v1499 = vld [vmem:[#allocation10 + $0x30] sm:$0xff]
    %v1500 = vld [vmem:[#allocation10 + $0x38] sm:$0xff]
    %v1501 = vld [vmem:[#allocation10 + $0x40] sm:$0xff]
    %v1502 = vld [vmem:[#allocation10 + $0x48] sm:$0xff]
    %v1503 = vld [vmem:[#allocation10 + $0x50] sm:$0xff]
    %v1504 = vld [vmem:[#allocation10 + $0x58] sm:$0xff]
    %v1505 = vld [vmem:[#allocation10 + $0x60] sm:$0xff]
    %v1506 = vld [vmem:[#allocation10 + $0x68] sm:$0xff]
    %v1507 = vld [vmem:[#allocation10 + $0x70] sm:$0xff]
    %v1508 = vld [vmem:[#allocation10 + $0x78] sm:$0xff]
    %v1509 = vld [vmem:[#allocation10 + $0x80] sm:$0xff]
    %v1510 = vld [vmem:[#allocation10 + $0x88] sm:$0xff]
    %v1511 = vld [vmem:[#allocation10 + $0x90] sm:$0xff]
    %v1512 = vld [vmem:[#allocation10 + $0x98] sm:$0xff]
    %v1513 = vld [vmem:[#allocation10 + $0xa0] sm:$0xff]
    %v1514 = vld [vmem:[#allocation10 + $0xa8] sm:$0xff]
    %v1515 = vld [vmem:[#allocation10 + $0xb0] sm:$0xff]
    %v1516 = vld [vmem:[#allocation10 + $0xb8] sm:$0xff]
    %v1517 = vld [vmem:[#allocation10 + $0xc0] sm:$0xff]
    %v1518 = vld [vmem:[#allocation10 + $0xc8] sm:$0xff]
    %v1519 = vld [vmem:[#allocation10 + $0xd0] sm:$0xff]
    %v1520 = vld [vmem:[#allocation10 + $0xd8] sm:$0xff]
    %v1521 = vld [vmem:[#allocation10 + $0xe0] sm:$0xff]
    %v1522 = vld [vmem:[#allocation10 + $0xe8] sm:$0xff]
    %v1523 = vld [vmem:[#allocation10 + $0xf0] sm:$0xff]
    %v1524 = vld [vmem:[#allocation10 + $0xf8] sm:$0xff]
    %v1557 = vunpack.c.l.b16 %v1493
    %v1558 = vunpack.c.h.b16 %v1493
    %v1559 = vunpack.c.l.b16 %v1494
    %v1560 = vunpack.c.h.b16 %v1494
    %v1561 = vunpack.c.l.b16 %v1495
    %v1562 = vunpack.c.h.b16 %v1495
    %v1563 = vunpack.c.l.b16 %v1496
    %v1564 = vunpack.c.h.b16 %v1496
    %v1565 = vunpack.c.l.b16 %v1497
    %v1566 = vunpack.c.h.b16 %v1497
    %v1567 = vunpack.c.l.b16 %v1498
    %v1568 = vunpack.c.h.b16 %v1498
    %v1569 = vunpack.c.l.b16 %v1499
    %v1570 = vunpack.c.h.b16 %v1499
    %v1571 = vunpack.c.l.b16 %v1500
    %v1572 = vunpack.c.h.b16 %v1500
    %v1573 = vunpack.c.l.b16 %v1501
    %v1574 = vunpack.c.h.b16 %v1501
    %v1575 = vunpack.c.l.b16 %v1502
    %v1576 = vunpack.c.h.b16 %v1502
    %v1577 = vunpack.c.l.b16 %v1503
    %v1578 = vunpack.c.h.b16 %v1503
    %v1579 = vunpack.c.l.b16 %v1504
    %v1580 = vunpack.c.h.b16 %v1504
    %v1581 = vunpack.c.l.b16 %v1505
    %v1582 = vunpack.c.h.b16 %v1505
    %v1583 = vunpack.c.l.b16 %v1506
    %v1584 = vunpack.c.h.b16 %v1506
    %v1585 = vunpack.c.l.b16 %v1507
    %v1586 = vunpack.c.h.b16 %v1507
    %v1587 = vunpack.c.l.b16 %v1508
    %v1588 = vunpack.c.h.b16 %v1508
    %v1589 = vunpack.c.l.b16 %v1509
    %v1590 = vunpack.c.h.b16 %v1509
    %v1591 = vunpack.c.l.b16 %v1510
    %v1592 = vunpack.c.h.b16 %v1510
    %v1593 = vunpack.c.l.b16 %v1511
    %v1594 = vunpack.c.h.b16 %v1511
    %v1595 = vunpack.c.l.b16 %v1512
    %v1596 = vunpack.c.h.b16 %v1512
    %v1597 = vunpack.c.l.b16 %v1513
    %v1598 = vunpack.c.h.b16 %v1513
    %v1599 = vunpack.c.l.b16 %v1514
    %v1600 = vunpack.c.h.b16 %v1514
    %v1601 = vunpack.c.l.b16 %v1515
    %v1602 = vunpack.c.h.b16 %v1515
    %v1603 = vunpack.c.l.b16 %v1516
    %v1604 = vunpack.c.h.b16 %v1516
    %v1605 = vunpack.c.l.b16 %v1517
    %v1606 = vunpack.c.h.b16 %v1517
    %v1607 = vunpack.c.l.b16 %v1518
    %v1608 = vunpack.c.h.b16 %v1518
    %v1609 = vunpack.c.l.b16 %v1519
    %v1610 = vunpack.c.h.b16 %v1519
    %v1611 = vunpack.c.l.b16 %v1520
    %v1612 = vunpack.c.h.b16 %v1520
    %v1613 = vunpack.c.l.b16 %v1521
    %v1614 = vunpack.c.h.b16 %v1521
    %v1615 = vunpack.c.l.b16 %v1522
    %v1616 = vunpack.c.h.b16 %v1522
    %v1617 = vunpack.c.l.b16 %v1523
    %v1618 = vunpack.c.h.b16 %v1523
    %v1619 = vunpack.c.l.b16 %v1524
    %v1620 = vunpack.c.h.b16 %v1524
    %v1621 = vpack.c.b16 %v1561, %v1557
    %v1622 = vpack.c.b16 %v1562, %v1558
    %v1623 = vpack.c.b16 %v1563, %v1559
    %v1624 = vpack.c.b16 %v1564, %v1560
    %v1625 = vpack.c.b16 %v1569, %v1565
    %v1626 = vpack.c.b16 %v1570, %v1566
    %v1627 = vpack.c.b16 %v1571, %v1567
    %v1628 = vpack.c.b16 %v1572, %v1568
    %v1629 = vpack.c.b16 %v1577, %v1573
    %v1630 = vpack.c.b16 %v1578, %v1574
    %v1631 = vpack.c.b16 %v1579, %v1575
    %v1632 = vpack.c.b16 %v1580, %v1576
    %v1633 = vpack.c.b16 %v1585, %v1581
    %v1634 = vpack.c.b16 %v1586, %v1582
    %v1635 = vpack.c.b16 %v1587, %v1583
    %v1636 = vpack.c.b16 %v1588, %v1584
    %v1637 = vpack.c.b16 %v1593, %v1589
    %v1638 = vpack.c.b16 %v1594, %v1590
    %v1639 = vpack.c.b16 %v1595, %v1591
    %v1640 = vpack.c.b16 %v1596, %v1592
    %v1641 = vpack.c.b16 %v1601, %v1597
    %v1642 = vpack.c.b16 %v1602, %v1598
    %v1643 = vpack.c.b16 %v1603, %v1599
    %v1644 = vpack.c.b16 %v1604, %v1600
    %v1645 = vpack.c.b16 %v1609, %v1605
    %v1646 = vpack.c.b16 %v1610, %v1606
    %v1647 = vpack.c.b16 %v1611, %v1607
    %v1648 = vpack.c.b16 %v1612, %v1608
    %v1649 = vpack.c.b16 %v1617, %v1613
    %v1650 = vpack.c.b16 %v1618, %v1614
    %v1651 = vpack.c.b16 %v1619, %v1615
    %v1652 = vpack.c.b16 %v1620, %v1616
    %1685 = vmatpush.bf16.msra.mxu0 %v1649
    %1686 = vmatpush.bf16.msra.mxu0 %v1645
    %1687 = vmatpush.bf16.msra.mxu0 %v1641
    %1688 = vmatpush.bf16.msra.mxu0 %v1637
    %1689 = vmatpush.bf16.msra.mxu0 %v1633
    %1690 = vmatpush.bf16.msra.mxu0 %v1629
    %1691 = vmatpush.bf16.msra.mxu0 %v1625
    %1692 = vmatpush.bf16.msra.mxu0 %v1621
    %1693 = vmatmul.bf16.gmra.mxu0 %v1492
    %v1694 = vpop.f32.mrf.mxu0
    %v1695 = vadd.f32 0.0, %v1694
    %v1696 = vpop.f32.mrf.mxu0
    %1697 = vdwg.mxu0
    %1698 = vmatpush.bf16.msra.mxu0 %v1650
    %1699 = vmatpush.bf16.msra.mxu0 %v1646
    %1700 = vmatpush.bf16.msra.mxu0 %v1642
    %1701 = vmatpush.bf16.msra.mxu0 %v1638
    %1702 = vmatpush.bf16.msra.mxu0 %v1634
    %1703 = vmatpush.bf16.msra.mxu0 %v1630
    %1704 = vmatpush.bf16.msra.mxu0 %v1626
    %1705 = vmatpush.bf16.msra.mxu0 %v1622
    %1706 = vmatmul.bf16.gmra.mxu0 %v1492
    %v1707 = vpop.f32.mrf.mxu0
    %v1708 = vadd.f32 0.0, %v1707
    %v1709 = vpop.f32.mrf.mxu0
    %1710 = vdwg.mxu0
    %1711 = vmatpush.bf16.msra.mxu0 %v1651
    %1712 = vmatpush.bf16.msra.mxu0 %v1647
    %1713 = vmatpush.bf16.msra.mxu0 %v1643
    %1714 = vmatpush.bf16.msra.mxu0 %v1639
    %1715 = vmatpush.bf16.msra.mxu0 %v1635
    %1716 = vmatpush.bf16.msra.mxu0 %v1631
    %1717 = vmatpush.bf16.msra.mxu0 %v1627
    %1718 = vmatpush.bf16.msra.mxu0 %v1623
    %1719 = vmatmul.bf16.gmra.mxu0 %v1492
    %v1720 = vpop.f32.mrf.mxu0
    %v1721 = vadd.f32 0.0, %v1720
    %v1722 = vpop.f32.mrf.mxu0
    %1723 = vdwg.mxu0
    %1724 = vmatpush.bf16.msra.mxu0 %v1652
    %1725 = vmatpush.bf16.msra.mxu0 %v1648
    %1726 = vmatpush.bf16.msra.mxu0 %v1644
    %1727 = vmatpush.bf16.msra.mxu0 %v1640
    %1728 = vmatpush.bf16.msra.mxu0 %v1636
    %1729 = vmatpush.bf16.msra.mxu0 %v1632
    %1730 = vmatpush.bf16.msra.mxu0 %v1628
    %1731 = vmatpush.bf16.msra.mxu0 %v1624
    %1732 = vmatmul.bf16.gmra.mxu0 %v1492
    %v1733 = vpop.f32.mrf.mxu0
    %v1734 = vadd.f32 0.0, %v1733
    %v1735 = vpop.f32.mrf.mxu0
    %1736 = vdwg.mxu0
    %v1737 = vadd.f32 %v1488, %v1695
    %v1738 = vadd.f32 %v1489, %v1708
    %v1739 = vadd.f32 %v1490, %v1721
    %v1740 = vadd.f32 %v1491, %v1734
    %v1741 = vmul.f32 %v1737, 0.5
    %v1742 = vmul.f32 %v1738, 0.5
    %v1743 = vmul.f32 %v1739, 0.5
    %v1744 = vtanh.pop %v1741
    %v1745 = vtanh.pop %v1742
    %v1746 = vtanh.pop %v1743
    %v1747 = vadd.f32 %v1744, 1.0
    %v1748 = vadd.f32 %v1745, 1.0
    %v1749 = vadd.f32 %v1746, 1.0
    %v1750 = vmul.f32 %v1747, 0.5
    %v1751 = vmul.f32 %v1748, 0.5
    %v1752 = vmul.f32 %v1749, 0.5
    %v1753 = vtanh.pop %v1740
    %v1754 = vmul.f32 %v1751, %v1484
    %v1755 = vmul.f32 %v1750, %v1753
    %v1756 = vadd.f32 %v1754, %v1755
    %v1757 = vtanh.pop %v1756
    %v1758 = vmul.f32 %v1752, %v1757
    %1759 = vst [vmem:[#allocation2] sm:$0xff] %v1758
    %1760 = vst [vmem:[#allocation3] sm:$0xff] %v1756
    %s1761 = scalar_lea.vmem [#allocation12], 40
    %1762 = vst [vmem:[%s1761] sm:$0xff] %v1758
    %v1763 = vld [vmem:[#allocation2] sm:$0xff]
    %v1764 = vld [vmem:[#allocation3] sm:$0xff]
    %s1765 = scalar_lea.vmem [#allocation4], 96
    %v1766 = vld [vmem:[%s1765] sm:$0xff]
    %v1767 = vld [vmem:[%s1765 + $0x8] sm:$0xff]
    %v1768 = vunpack.c.l.bf16 %v1766
    %v1769 = vunpack.c.h.bf16 %v1766
    %v1770 = vunpack.c.l.bf16 %v1767
    %v1771 = vunpack.c.h.bf16 %v1767
    %v1772 = vpack.c.bf16 %v1763, %v1763
    %v1773 = vld [vmem:[#allocation10] sm:$0xff]
    %v1774 = vld [vmem:[#allocation10 + $0x8] sm:$0xff]
    %v1775 = vld [vmem:[#allocation10 + $0x10] sm:$0xff]
    %v1776 = vld [vmem:[#allocation10 + $0x18] sm:$0xff]
    %v1777 = vld [vmem:[#allocation10 + $0x20] sm:$0xff]
    %v1778 = vld [vmem:[#allocation10 + $0x28] sm:$0xff]
    %v1779 = vld [vmem:[#allocation10 + $0x30] sm:$0xff]
    %v1780 = vld [vmem:[#allocation10 + $0x38] sm:$0xff]
    %v1781 = vld [vmem:[#allocation10 + $0x40] sm:$0xff]
    %v1782 = vld [vmem:[#allocation10 + $0x48] sm:$0xff]
    %v1783 = vld [vmem:[#allocation10 + $0x50] sm:$0xff]
    %v1784 = vld [vmem:[#allocation10 + $0x58] sm:$0xff]
    %v1785 = vld [vmem:[#allocation10 + $0x60] sm:$0xff]
    %v1786 = vld [vmem:[#allocation10 + $0x68] sm:$0xff]
    %v1787 = vld [vmem:[#allocation10 + $0x70] sm:$0xff]
    %v1788 = vld [vmem:[#allocation10 + $0x78] sm:$0xff]
    %v1789 = vld [vmem:[#allocation10 + $0x80] sm:$0xff]
    %v1790 = vld [vmem:[#allocation10 + $0x88] sm:$0xff]
    %v1791 = vld [vmem:[#allocation10 + $0x90] sm:$0xff]
    %v1792 = vld [vmem:[#allocation10 + $0x98] sm:$0xff]
    %v1793 = vld [vmem:[#allocation10 + $0xa0] sm:$0xff]
    %v1794 = vld [vmem:[#allocation10 + $0xa8] sm:$0xff]
    %v1795 = vld [vmem:[#allocation10 + $0xb0] sm:$0xff]
    %v1796 = vld [vmem:[#allocation10 + $0xb8] sm:$0xff]
    %v1797 = vld [vmem:[#allocation10 + $0xc0] sm:$0xff]
    %v1798 = vld [vmem:[#allocation10 + $0xc8] sm:$0xff]
    %v1799 = vld [vmem:[#allocation10 + $0xd0] sm:$0xff]
    %v1800 = vld [vmem:[#allocation10 + $0xd8] sm:$0xff]
    %v1801 = vld [vmem:[#allocation10 + $0xe0] sm:$0xff]
    %v1802 = vld [vmem:[#allocation10 + $0xe8] sm:$0xff]
    %v1803 = vld [vmem:[#allocation10 + $0xf0] sm:$0xff]
    %v1804 = vld [vmem:[#allocation10 + $0xf8] sm:$0xff]
    %v1837 = vunpack.c.l.b16 %v1773
    %v1838 = vunpack.c.h.b16 %v1773
    %v1839 = vunpack.c.l.b16 %v1774
    %v1840 = vunpack.c.h.b16 %v1774
    %v1841 = vunpack.c.l.b16 %v1775
    %v1842 = vunpack.c.h.b16 %v1775
    %v1843 = vunpack.c.l.b16 %v1776
    %v1844 = vunpack.c.h.b16 %v1776
    %v1845 = vunpack.c.l.b16 %v1777
    %v1846 = vunpack.c.h.b16 %v1777
    %v1847 = vunpack.c.l.b16 %v1778
    %v1848 = vunpack.c.h.b16 %v1778
    %v1849 = vunpack.c.l.b16 %v1779
    %v1850 = vunpack.c.h.b16 %v1779
    %v1851 = vunpack.c.l.b16 %v1780
    %v1852 = vunpack.c.h.b16 %v1780
    %v1853 = vunpack.c.l.b16 %v1781
    %v1854 = vunpack.c.h.b16 %v1781
    %v1855 = vunpack.c.l.b16 %v1782
    %v1856 = vunpack.c.h.b16 %v1782
    %v1857 = vunpack.c.l.b16 %v1783
    %v1858 = vunpack.c.h.b16 %v1783
    %v1859 = vunpack.c.l.b16 %v1784
    %v1860 = vunpack.c.h.b16 %v1784
    %v1861 = vunpack.c.l.b16 %v1785
    %v1862 = vunpack.c.h.b16 %v1785
    %v1863 = vunpack.c.l.b16 %v1786
    %v1864 = vunpack.c.h.b16 %v1786
    %v1865 = vunpack.c.l.b16 %v1787
    %v1866 = vunpack.c.h.b16 %v1787
    %v1867 = vunpack.c.l.b16 %v1788
    %v1868 = vunpack.c.h.b16 %v1788
    %v1869 = vunpack.c.l.b16 %v1789
    %v1870 = vunpack.c.h.b16 %v1789
    %v1871 = vunpack.c.l.b16 %v1790
    %v1872 = vunpack.c.h.b16 %v1790
    %v1873 = vunpack.c.l.b16 %v1791
    %v1874 = vunpack.c.h.b16 %v1791
    %v1875 = vunpack.c.l.b16 %v1792
    %v1876 = vunpack.c.h.b16 %v1792
    %v1877 = vunpack.c.l.b16 %v1793
    %v1878 = vunpack.c.h.b16 %v1793
    %v1879 = vunpack.c.l.b16 %v1794
    %v1880 = vunpack.c.h.b16 %v1794
    %v1881 = vunpack.c.l.b16 %v1795
    %v1882 = vunpack.c.h.b16 %v1795
    %v1883 = vunpack.c.l.b16 %v1796
    %v1884 = vunpack.c.h.b16 %v1796
    %v1885 = vunpack.c.l.b16 %v1797
    %v1886 = vunpack.c.h.b16 %v1797
    %v1887 = vunpack.c.l.b16 %v1798
    %v1888 = vunpack.c.h.b16 %v1798
    %v1889 = vunpack.c.l.b16 %v1799
    %v1890 = vunpack.c.h.b16 %v1799
    %v1891 = vunpack.c.l.b16 %v1800
    %v1892 = vunpack.c.h.b16 %v1800
    %v1893 = vunpack.c.l.b16 %v1801
    %v1894 = vunpack.c.h.b16 %v1801
    %v1895 = vunpack.c.l.b16 %v1802
    %v1896 = vunpack.c.h.b16 %v1802
    %v1897 = vunpack.c.l.b16 %v1803
    %v1898 = vunpack.c.h.b16 %v1803
    %v1899 = vunpack.c.l.b16 %v1804
    %v1900 = vunpack.c.h.b16 %v1804
    %v1901 = vpack.c.b16 %v1841, %v1837
    %v1902 = vpack.c.b16 %v1842, %v1838
    %v1903 = vpack.c.b16 %v1843, %v1839
    %v1904 = vpack.c.b16 %v1844, %v1840
    %v1905 = vpack.c.b16 %v1849, %v1845
    %v1906 = vpack.c.b16 %v1850, %v1846
    %v1907 = vpack.c.b16 %v1851, %v1847
    %v1908 = vpack.c.b16 %v1852, %v1848
    %v1909 = vpack.c.b16 %v1857, %v1853
    %v1910 = vpack.c.b16 %v1858, %v1854
    %v1911 = vpack.c.b16 %v1859, %v1855
    %v1912 = vpack.c.b16 %v1860, %v1856
    %v1913 = vpack.c.b16 %v1865, %v1861
    %v1914 = vpack.c.b16 %v1866, %v1862
    %v1915 = vpack.c.b16 %v1867, %v1863
    %v1916 = vpack.c.b16 %v1868, %v1864
    %v1917 = vpack.c.b16 %v1873, %v1869
    %v1918 = vpack.c.b16 %v1874, %v1870
    %v1919 = vpack.c.b16 %v1875, %v1871
    %v1920 = vpack.c.b16 %v1876, %v1872
    %v1921 = vpack.c.b16 %v1881, %v1877
    %v1922 = vpack.c.b16 %v1882, %v1878
    %v1923 = vpack.c.b16 %v1883, %v1879
    %v1924 = vpack.c.b16 %v1884, %v1880
    %v1925 = vpack.c.b16 %v1889, %v1885
    %v1926 = vpack.c.b16 %v1890, %v1886
    %v1927 = vpack.c.b16 %v1891, %v1887
    %v1928 = vpack.c.b16 %v1892, %v1888
    %v1929 = vpack.c.b16 %v1897, %v1893
    %v1930 = vpack.c.b16 %v1898, %v1894
    %v1931 = vpack.c.b16 %v1899, %v1895
    %v1932 = vpack.c.b16 %v1900, %v1896
    %1965 = vmatpush.bf16.msra.mxu0 %v1929
    %1966 = vmatpush.bf16.msra.mxu0 %v1925
    %1967 = vmatpush.bf16.msra.mxu0 %v1921
    %1968 = vmatpush.bf16.msra.mxu0 %v1917
    %1969 = vmatpush.bf16.msra.mxu0 %v1913
    %1970 = vmatpush.bf16.msra.mxu0 %v1909
    %1971 = vmatpush.bf16.msra.mxu0 %v1905
    %1972 = vmatpush.bf16.msra.mxu0 %v1901
    %1973 = vmatmul.bf16.gmra.mxu0 %v1772
    %v1974 = vpop.f32.mrf.mxu0
    %v1975 = vadd.f32 0.0, %v1974
    %v1976 = vpop.f32.mrf.mxu0
    %1977 = vdwg.mxu0
    %1978 = vmatpush.bf16.msra.mxu0 %v1930
    %1979 = vmatpush.bf16.msra.mxu0 %v1926
    %1980 = vmatpush.bf16.msra.mxu0 %v1922
    %1981 = vmatpush.bf16.msra.mxu0 %v1918
    %1982 = vmatpush.bf16.msra.mxu0 %v1914
    %1983 = vmatpush.bf16.msra.mxu0 %v1910
    %1984 = vmatpush.bf16.msra.mxu0 %v1906
    %1985 = vmatpush.bf16.msra.mxu0 %v1902
    %1986 = vmatmul.bf16.gmra.mxu0 %v1772
    %v1987 = vpop.f32.mrf.mxu0
    %v1988 = vadd.f32 0.0, %v1987
    %v1989 = vpop.f32.mrf.mxu0
    %1990 = vdwg.mxu0
    %1991 = vmatpush.bf16.msra.mxu0 %v1931
    %1992 = vmatpush.bf16.msra.mxu0 %v1927
    %1993 = vmatpush.bf16.msra.mxu0 %v1923
    %1994 = vmatpush.bf16.msra.mxu0 %v1919
    %1995 = vmatpush.bf16.msra.mxu0 %v1915
    %1996 = vmatpush.bf16.msra.mxu0 %v1911
    %1997 = vmatpush.bf16.msra.mxu0 %v1907
    %1998 = vmatpush.bf16.msra.mxu0 %v1903
    %1999 = vmatmul.bf16.gmra.mxu0 %v1772
    %v2000 = vpop.f32.mrf.mxu0
    %v2001 = vadd.f32 0.0, %v2000
    %v2002 = vpop.f32.mrf.mxu0
    %2003 = vdwg.mxu0
    %2004 = vmatpush.bf16.msra.mxu0 %v1932
    %2005 = vmatpush.bf16.msra.mxu0 %v1928
    %2006 = vmatpush.bf16.msra.mxu0 %v1924
    %2007 = vmatpush.bf16.msra.mxu0 %v1920
    %2008 = vmatpush.bf16.msra.mxu0 %v1916
    %2009 = vmatpush.bf16.msra.mxu0 %v1912
    %2010 = vmatpush.bf16.msra.mxu0 %v1908
    %2011 = vmatpush.bf16.msra.mxu0 %v1904
    %2012 = vmatmul.bf16.gmra.mxu0 %v1772
    %v2013 = vpop.f32.mrf.mxu0
    %v2014 = vadd.f32 0.0, %v2013
    %v2015 = vpop.f32.mrf.mxu0
    %2016 = vdwg.mxu0
    %v2017 = vadd.f32 %v1768, %v1975
    %v2018 = vadd.f32 %v1769, %v1988
    %v2019 = vadd.f32 %v1770, %v2001
    %v2020 = vadd.f32 %v1771, %v2014
    %v2021 = vmul.f32 %v2017, 0.5
    %v2022 = vmul.f32 %v2018, 0.5
    %v2023 = vmul.f32 %v2019, 0.5
    %v2024 = vtanh.pop %v2021
    %v2025 = vtanh.pop %v2022
    %v2026 = vtanh.pop %v2023
    %v2027 = vadd.f32 %v2024, 1.0
    %v2028 = vadd.f32 %v2025, 1.0
    %v2029 = vadd.f32 %v2026, 1.0
    %v2030 = vmul.f32 %v2027, 0.5
    %v2031 = vmul.f32 %v2028, 0.5
    %v2032 = vmul.f32 %v2029, 0.5
    %v2033 = vtanh.pop %v2020
    %v2034 = vmul.f32 %v2031, %v1764
    %v2035 = vmul.f32 %v2030, %v2033
    %v2036 = vadd.f32 %v2034, %v2035
    %v2037 = vtanh.pop %v2036
    %v2038 = vmul.f32 %v2032, %v2037
    %2039 = vst [vmem:[#allocation2] sm:$0xff] %v2038
    %2040 = vst [vmem:[#allocation3] sm:$0xff] %v2036
    %s2041 = scalar_lea.vmem [#allocation12], 48
    %2042 = vst [vmem:[%s2041] sm:$0xff] %v2038
    %v2043 = vld [vmem:[#allocation2] sm:$0xff]
    %v2044 = vld [vmem:[#allocation3] sm:$0xff]
    %s2045 = scalar_lea.vmem [#allocation4], 112
    %v2046 = vld [vmem:[%s2045] sm:$0xff]
    %v2047 = vld [vmem:[%s2045 + $0x8] sm:$0xff]
    %v2048 = vunpack.c.l.bf16 %v2046
    %v2049 = vunpack.c.h.bf16 %v2046
    %v2050 = vunpack.c.l.bf16 %v2047
    %v2051 = vunpack.c.h.bf16 %v2047
    %v2052 = vpack.c.bf16 %v2043, %v2043
    %v2053 = vld [vmem:[#allocation10] sm:$0xff]
    %v2054 = vld [vmem:[#allocation10 + $0x8] sm:$0xff]
    %v2055 = vld [vmem:[#allocation10 + $0x10] sm:$0xff]
    %v2056 = vld [vmem:[#allocation10 + $0x18] sm:$0xff]
    %v2057 = vld [vmem:[#allocation10 + $0x20] sm:$0xff]
    %v2058 = vld [vmem:[#allocation10 + $0x28] sm:$0xff]
    %v2059 = vld [vmem:[#allocation10 + $0x30] sm:$0xff]
    %v2060 = vld [vmem:[#allocation10 + $0x38] sm:$0xff]
    %v2061 = vld [vmem:[#allocation10 + $0x40] sm:$0xff]
    %v2062 = vld [vmem:[#allocation10 + $0x48] sm:$0xff]
    %v2063 = vld [vmem:[#allocation10 + $0x50] sm:$0xff]
    %v2064 = vld [vmem:[#allocation10 + $0x58] sm:$0xff]
    %v2065 = vld [vmem:[#allocation10 + $0x60] sm:$0xff]
    %v2066 = vld [vmem:[#allocation10 + $0x68] sm:$0xff]
    %v2067 = vld [vmem:[#allocation10 + $0x70] sm:$0xff]
    %v2068 = vld [vmem:[#allocation10 + $0x78] sm:$0xff]
    %v2069 = vld [vmem:[#allocation10 + $0x80] sm:$0xff]
    %v2070 = vld [vmem:[#allocation10 + $0x88] sm:$0xff]
    %v2071 = vld [vmem:[#allocation10 + $0x90] sm:$0xff]
    %v2072 = vld [vmem:[#allocation10 + $0x98] sm:$0xff]
    %v2073 = vld [vmem:[#allocation10 + $0xa0] sm:$0xff]
    %v2074 = vld [vmem:[#allocation10 + $0xa8] sm:$0xff]
    %v2075 = vld [vmem:[#allocation10 + $0xb0] sm:$0xff]
    %v2076 = vld [vmem:[#allocation10 + $0xb8] sm:$0xff]
    %v2077 = vld [vmem:[#allocation10 + $0xc0] sm:$0xff]
    %v2078 = vld [vmem:[#allocation10 + $0xc8] sm:$0xff]
    %v2079 = vld [vmem:[#allocation10 + $0xd0] sm:$0xff]
    %v2080 = vld [vmem:[#allocation10 + $0xd8] sm:$0xff]
    %v2081 = vld [vmem:[#allocation10 + $0xe0] sm:$0xff]
    %v2082 = vld [vmem:[#allocation10 + $0xe8] sm:$0xff]
    %v2083 = vld [vmem:[#allocation10 + $0xf0] sm:$0xff]
    %v2084 = vld [vmem:[#allocation10 + $0xf8] sm:$0xff]
    %v2117 = vunpack.c.l.b16 %v2053
    %v2118 = vunpack.c.h.b16 %v2053
    %v2119 = vunpack.c.l.b16 %v2054
    %v2120 = vunpack.c.h.b16 %v2054
    %v2121 = vunpack.c.l.b16 %v2055
    %v2122 = vunpack.c.h.b16 %v2055
    %v2123 = vunpack.c.l.b16 %v2056
    %v2124 = vunpack.c.h.b16 %v2056
    %v2125 = vunpack.c.l.b16 %v2057
    %v2126 = vunpack.c.h.b16 %v2057
    %v2127 = vunpack.c.l.b16 %v2058
    %v2128 = vunpack.c.h.b16 %v2058
    %v2129 = vunpack.c.l.b16 %v2059
    %v2130 = vunpack.c.h.b16 %v2059
    %v2131 = vunpack.c.l.b16 %v2060
    %v2132 = vunpack.c.h.b16 %v2060
    %v2133 = vunpack.c.l.b16 %v2061
    %v2134 = vunpack.c.h.b16 %v2061
    %v2135 = vunpack.c.l.b16 %v2062
    %v2136 = vunpack.c.h.b16 %v2062
    %v2137 = vunpack.c.l.b16 %v2063
    %v2138 = vunpack.c.h.b16 %v2063
    %v2139 = vunpack.c.l.b16 %v2064
    %v2140 = vunpack.c.h.b16 %v2064
    %v2141 = vunpack.c.l.b16 %v2065
    %v2142 = vunpack.c.h.b16 %v2065
    %v2143 = vunpack.c.l.b16 %v2066
    %v2144 = vunpack.c.h.b16 %v2066
    %v2145 = vunpack.c.l.b16 %v2067
    %v2146 = vunpack.c.h.b16 %v2067
    %v2147 = vunpack.c.l.b16 %v2068
    %v2148 = vunpack.c.h.b16 %v2068
    %v2149 = vunpack.c.l.b16 %v2069
    %v2150 = vunpack.c.h.b16 %v2069
    %v2151 = vunpack.c.l.b16 %v2070
    %v2152 = vunpack.c.h.b16 %v2070
    %v2153 = vunpack.c.l.b16 %v2071
    %v2154 = vunpack.c.h.b16 %v2071
    %v2155 = vunpack.c.l.b16 %v2072
    %v2156 = vunpack.c.h.b16 %v2072
    %v2157 = vunpack.c.l.b16 %v2073
    %v2158 = vunpack.c.h.b16 %v2073
    %v2159 = vunpack.c.l.b16 %v2074
    %v2160 = vunpack.c.h.b16 %v2074
    %v2161 = vunpack.c.l.b16 %v2075
    %v2162 = vunpack.c.h.b16 %v2075
    %v2163 = vunpack.c.l.b16 %v2076
    %v2164 = vunpack.c.h.b16 %v2076
    %v2165 = vunpack.c.l.b16 %v2077
    %v2166 = vunpack.c.h.b16 %v2077
    %v2167 = vunpack.c.l.b16 %v2078
    %v2168 = vunpack.c.h.b16 %v2078
    %v2169 = vunpack.c.l.b16 %v2079
    %v2170 = vunpack.c.h.b16 %v2079
    %v2171 = vunpack.c.l.b16 %v2080
    %v2172 = vunpack.c.h.b16 %v2080
    %v2173 = vunpack.c.l.b16 %v2081
    %v2174 = vunpack.c.h.b16 %v2081
    %v2175 = vunpack.c.l.b16 %v2082
    %v2176 = vunpack.c.h.b16 %v2082
    %v2177 = vunpack.c.l.b16 %v2083
    %v2178 = vunpack.c.h.b16 %v2083
    %v2179 = vunpack.c.l.b16 %v2084
    %v2180 = vunpack.c.h.b16 %v2084
    %v2181 = vpack.c.b16 %v2121, %v2117
    %v2182 = vpack.c.b16 %v2122, %v2118
    %v2183 = vpack.c.b16 %v2123, %v2119
    %v2184 = vpack.c.b16 %v2124, %v2120
    %v2185 = vpack.c.b16 %v2129, %v2125
    %v2186 = vpack.c.b16 %v2130, %v2126
    %v2187 = vpack.c.b16 %v2131, %v2127
    %v2188 = vpack.c.b16 %v2132, %v2128
    %v2189 = vpack.c.b16 %v2137, %v2133
    %v2190 = vpack.c.b16 %v2138, %v2134
    %v2191 = vpack.c.b16 %v2139, %v2135
    %v2192 = vpack.c.b16 %v2140, %v2136
    %v2193 = vpack.c.b16 %v2145, %v2141
    %v2194 = vpack.c.b16 %v2146, %v2142
    %v2195 = vpack.c.b16 %v2147, %v2143
    %v2196 = vpack.c.b16 %v2148, %v2144
    %v2197 = vpack.c.b16 %v2153, %v2149
    %v2198 = vpack.c.b16 %v2154, %v2150
    %v2199 = vpack.c.b16 %v2155, %v2151
    %v2200 = vpack.c.b16 %v2156, %v2152
    %v2201 = vpack.c.b16 %v2161, %v2157
    %v2202 = vpack.c.b16 %v2162, %v2158
    %v2203 = vpack.c.b16 %v2163, %v2159
    %v2204 = vpack.c.b16 %v2164, %v2160
    %v2205 = vpack.c.b16 %v2169, %v2165
    %v2206 = vpack.c.b16 %v2170, %v2166
    %v2207 = vpack.c.b16 %v2171, %v2167
    %v2208 = vpack.c.b16 %v2172, %v2168
    %v2209 = vpack.c.b16 %v2177, %v2173
    %v2210 = vpack.c.b16 %v2178, %v2174
    %v2211 = vpack.c.b16 %v2179, %v2175
    %v2212 = vpack.c.b16 %v2180, %v2176
    %2245 = vmatpush.bf16.msra.mxu0 %v2209
    %2246 = vmatpush.bf16.msra.mxu0 %v2205
    %2247 = vmatpush.bf16.msra.mxu0 %v2201
    %2248 = vmatpush.bf16.msra.mxu0 %v2197
    %2249 = vmatpush.bf16.msra.mxu0 %v2193
    %2250 = vmatpush.bf16.msra.mxu0 %v2189
    %2251 = vmatpush.bf16.msra.mxu0 %v2185
    %2252 = vmatpush.bf16.msra.mxu0 %v2181
    %2253 = vmatmul.bf16.gmra.mxu0 %v2052
    %v2254 = vpop.f32.mrf.mxu0
    %v2255 = vadd.f32 0.0, %v2254
    %v2256 = vpop.f32.mrf.mxu0
    %2257 = vdwg.mxu0
    %2258 = vmatpush.bf16.msra.mxu0 %v2210
    %2259 = vmatpush.bf16.msra.mxu0 %v2206
    %2260 = vmatpush.bf16.msra.mxu0 %v2202
    %2261 = vmatpush.bf16.msra.mxu0 %v2198
    %2262 = vmatpush.bf16.msra.mxu0 %v2194
    %2263 = vmatpush.bf16.msra.mxu0 %v2190
    %2264 = vmatpush.bf16.msra.mxu0 %v2186
    %2265 = vmatpush.bf16.msra.mxu0 %v2182
    %2266 = vmatmul.bf16.gmra.mxu0 %v2052
    %v2267 = vpop.f32.mrf.mxu0
    %v2268 = vadd.f32 0.0, %v2267
    %v2269 = vpop.f32.mrf.mxu0
    %2270 = vdwg.mxu0
    %2271 = vmatpush.bf16.msra.mxu0 %v2211
    %2272 = vmatpush.bf16.msra.mxu0 %v2207
    %2273 = vmatpush.bf16.msra.mxu0 %v2203
    %2274 = vmatpush.bf16.msra.mxu0 %v2199
    %2275 = vmatpush.bf16.msra.mxu0 %v2195
    %2276 = vmatpush.bf16.msra.mxu0 %v2191
    %2277 = vmatpush.bf16.msra.mxu0 %v2187
    %2278 = vmatpush.bf16.msra.mxu0 %v2183
    %2279 = vmatmul.bf16.gmra.mxu0 %v2052
    %v2280 = vpop.f32.mrf.mxu0
    %v2281 = vadd.f32 0.0, %v2280
    %v2282 = vpop.f32.mrf.mxu0
    %2283 = vdwg.mxu0
    %2284 = vmatpush.bf16.msra.mxu0 %v2212
    %2285 = vmatpush.bf16.msra.mxu0 %v2208
    %2286 = vmatpush.bf16.msra.mxu0 %v2204
    %2287 = vmatpush.bf16.msra.mxu0 %v2200
    %2288 = vmatpush.bf16.msra.mxu0 %v2196
    %2289 = vmatpush.bf16.msra.mxu0 %v2192
    %2290 = vmatpush.bf16.msra.mxu0 %v2188
    %2291 = vmatpush.bf16.msra.mxu0 %v2184
    %2292 = vmatmul.bf16.gmra.mxu0 %v2052
    %v2293 = vpop.f32.mrf.mxu0
    %v2294 = vadd.f32 0.0, %v2293
    %v2295 = vpop.f32.mrf.mxu0
    %2296 = vdwg.mxu0
    %v2297 = vadd.f32 %v2048, %v2255
    %v2298 = vadd.f32 %v2049, %v2268
    %v2299 = vadd.f32 %v2050, %v2281
    %v2300 = vadd.f32 %v2051, %v2294
    %v2301 = vmul.f32 %v2297, 0.5
    %v2302 = vmul.f32 %v2298, 0.5
    %v2303 = vmul.f32 %v2299, 0.5
    %v2304 = vtanh.pop %v2301
    %v2305 = vtanh.pop %v2302
    %v2306 = vtanh.pop %v2303
    %v2307 = vadd.f32 %v2304, 1.0
    %v2308 = vadd.f32 %v2305, 1.0
    %v2309 = vadd.f32 %v2306, 1.0
    %v2310 = vmul.f32 %v2307, 0.5
    %v2311 = vmul.f32 %v2308, 0.5
    %v2312 = vmul.f32 %v2309, 0.5
    %v2313 = vtanh.pop %v2300
    %v2314 = vmul.f32 %v2311, %v2044
    %v2315 = vmul.f32 %v2310, %v2313
    %v2316 = vadd.f32 %v2314, %v2315
    %v2317 = vtanh.pop %v2316
    %v2318 = vmul.f32 %v2312, %v2317
    %2319 = vst [vmem:[#allocation2] sm:$0xff] %v2318
    %2320 = vst [vmem:[#allocation3] sm:$0xff] %v2316
    %s2321 = scalar_lea.vmem [#allocation12], 56
    %2322 = vst [vmem:[%s2321] sm:$0xff] %v2318
    // Predicated region
    $region38: #{tpu_custom_call.1} parent=1 // pred_check
      _
    $region39: #{tpu_custom_call.1} parent=1 // pred_check_branch
      %2324 = sbr.rel (0) target = $region41
    $region40: #{tpu_custom_call.1} parent=1 // pred_region
      %2326 = vsyncadd [#allocation6], 0
      %s2327 = sshll.u32 [#allocation12], 4
      %s2328 = int_to_ptr.vmem [resolvable:$true] %s2327
      %s2329 = sshll.u32 %s4, 4
      %s2330 = int_to_ptr.hbm [resolvable:$true] %s2329
      %2335 = dma.vmem_to_hbm [thread:$0]  %s2328, 1024, %s2330, [#allocation6], 128, 128, 8
    $region41: #{tpu_custom_call.1} parent=1 // pred_fallthru
      _
    // Predicated region
    $region42: #{tpu_custom_call.1} parent=1 // pred_check
      _
    $region43: #{tpu_custom_call.1} parent=1 // pred_check_branch
      %2337 = sbr.rel (0) target = $region45
    $region44: #{tpu_custom_call.1} parent=1 // pred_region
      %2339 = dma.done [#allocation6], 1024
    $region45: #{tpu_custom_call.1} parent=1 // pred_fallthru
      _
    %2340 = vsyncpa [#allocation5], 1
    %2341 = vsyncpa [#allocation8], 1
    %2342 = vsyncpa [#allocation11], 1
    %2343 = vsyncpa [#allocation6], 1

</llo_original>
